<compile_context>
chip_gen: v5e
topology: v5e:2x2
jax: 0.10.0
libtpu: 0.0.40
codegen_flags: <defaults>
</compile_context>

<pallas_src>
import math

import jax
import jax.numpy as jnp
from jax.experimental import pallas as pl
from jax.experimental.pallas import tpu as pltpu

EPS = 1e-5        # torch.nn.BatchNorm2d default
HALO_TOP = 8      # top halo rows so the interior starts sublane-aligned


def _resblock_group_kernel(x_ref, w1_ref, g1l_ref, b1l_ref,
                           w2_ref, g2l_ref, b2l_ref,
                           s1_ref, s1t_ref, s2_ref, s2t_ref,
                           out_ref, xpad_scr, ypad_scr):
    """All residual blocks applied to a VMEM-resident activation."""
    HT = HALO_TOP
    N, hpad, WCp = xpad_scr.shape
    H = hpad - HT - 1
    WCh = ypad_scr.shape[-1]
    Cp = s2_ref.shape[-1]
    W = WCp // Cp
    R = N * H
    inv_count = 1.0 / (R * W)            # N*H*W elements per channel
    n_blocks = w1_ref.shape[0]

    # ---- one-time init: zero only the two halo rows, load x into interior ----
    xpad_scr[:, HT - 1:HT, :] = jnp.zeros((N, 1, WCp), jnp.float32)
    xpad_scr[:, HT + H:HT + H + 1, :] = jnp.zeros((N, 1, WCp), jnp.float32)
    ypad_scr[:, HT - 1:HT, :] = jnp.zeros((N, 1, WCh), jnp.bfloat16)
    ypad_scr[:, HT + H:HT + H + 1, :] = jnp.zeros((N, 1, WCh), jnp.bfloat16)
    xpad_scr[:, HT:HT + H, :] = x_ref[...].astype(jnp.float32)

    def conv3x3(pad_scr, w):
        # im2col over the 3 kernel rows -> a single deep-K MXU matmul (bf16 in,
        # f32 accumulate).  The banded weights fold the dx taps and the
        # W-direction zero padding into the contraction.
        k_width = pad_scr.shape[-1]
        slabs = [pad_scr[:, HT - 1 + dy:HT - 1 + dy + H, :]
                 .reshape(R, k_width).astype(jnp.bfloat16)
                 for dy in range(3)]
        return jnp.dot(jnp.concatenate(slabs, axis=-1), w,
                       preferred_element_type=jnp.float32)

    def bn_relu(a, s_ref_, st_ref_, g_l, b_l):
        # Training-mode BN (biased variance), batched M=2 pool/broadcast matmuls
        # kept entirely in f32.
        moments = jnp.concatenate(
            [jnp.sum(a, axis=0, keepdims=True),
             jnp.sum(a * a, axis=0, keepdims=True)], axis=0)            # (2, W*C)
        ch = jnp.dot(moments, s_ref_[...],
                     preferred_element_type=jnp.float32) * inv_count     # (2, C)
        mu = ch[0:1]
        var = ch[1:2] - mu * mu
        mv_l = jnp.dot(jnp.concatenate([mu, var], axis=0), st_ref_[...],
                       preferred_element_type=jnp.float32)               # (2, W*C)
        scale_l = g_l * jax.lax.rsqrt(mv_l[1:2] + EPS)
        return jnp.maximum((a - mv_l[0:1]) * scale_l + b_l, 0.0)

    @pl.loop(0, n_blocks)
    def _(b):
        # ---- conv1 -> bn1 -> relu ----
        y = bn_relu(conv3x3(xpad_scr, w1_ref[b]), s1_ref, s1t_ref,
                    g1l_ref[b], b1l_ref[b])                              # (R, W*Ch)
        ypad_scr[:, HT:HT + H, :] = y.reshape(N, H, WCh).astype(jnp.bfloat16)
        # ---- conv2 -> bn2 -> relu ----
        z = bn_relu(conv3x3(ypad_scr, w2_ref[b]), s2_ref, s2t_ref,
                    g2l_ref[b], b2l_ref[b])                              # (R, W*Cp)
        # ---- residual update of the VMEM-resident activation ----
        xpad_scr[:, HT:HT + H, :] = (xpad_scr[:, HT:HT + H, :]
                                     + z.reshape(N, H, WCp))

    out_ref[...] = xpad_scr[:, HT:HT + H, :].astype(out_ref.dtype)


def _banded_weights(w_hwio, width):
    """(3, 3, Cin, Cout) HWIO conv weight -> (3, width*Cin, width*Cout) banded mats.

    B[dy][jp*Cin+ci, j*Cout+co] = w[dy, jp-j+1, ci, co] for |jp-j| <= 1 else 0.
    Missing off-edge taps implement the conv's zero padding along W.
    """
    mats = []
    for dy in range(3):
        b = None
        for dx in range(3):
            band = jnp.kron(jnp.eye(width, k=1 - dx, dtype=w_hwio.dtype),
                            w_hwio[dy, dx])
            b = band if b is None else b + band
        mats.append(b)
    return jnp.stack(mats)


def _pad_last(a, new_size):
    return jnp.pad(a, [(0, 0)] * (a.ndim - 1) + [(0, new_size - a.shape[-1])])


def basic_residual_block_group(x_nchw, block_params):
    """Matches BasicResidualBlockGroup.forward on NCHW input (training-mode BN)."""
    N, C, H, W = x_nchw.shape
    nb = len(block_params)
    Ch = block_params[0]["w1"].shape[-1]

    # Pad channel counts so the lane dimension (W*channels) is a multiple of 128.
    unit = 128 // math.gcd(W, 128)
    Cp = -(-C // unit) * unit
    Chp = -(-Ch // unit) * unit

    # ---- parameter preprocessing (plain XLA, once per call) ----
    w1b, w2b, g1l, b1l, g2l, b2l = [], [], [], [], [], []
    for p in block_params:
        w1 = _pad_last(jnp.pad(p["w1"], ((0, 0), (0, 0), (0, Cp - C), (0, 0))), Chp)
        w2 = _pad_last(jnp.pad(p["w2"], ((0, 0), (0, 0), (0, Chp - Ch), (0, 0))), Cp)
        w1b.append(_banded_weights(w1, W).reshape(3 * W * Cp, W * Chp))
        w2b.append(_banded_weights(w2, W).reshape(3 * W * Chp, W * Cp))
        g1l.append(jnp.tile(_pad_last(p["g1"], Chp), (1, W)))     # gamma -> lanes
        b1l.append(jnp.tile(_pad_last(p["beta1"], Chp), (1, W)))
        g2l.append(jnp.tile(_pad_last(p["g2"], Cp), (1, W)))
        b2l.append(jnp.tile(_pad_last(p["beta2"], Cp), (1, W)))
    w1b = jnp.stack(w1b).astype(jnp.bfloat16)      # (nb, 3*W*Cp,  W*Chp)
    w2b = jnp.stack(w2b).astype(jnp.bfloat16)      # (nb, 3*W*Chp, W*Cp)
    g1l = jnp.stack(g1l).astype(jnp.float32)       # (nb, 1, W*Chp)
    b1l = jnp.stack(b1l).astype(jnp.float32)
    g2l = jnp.stack(g2l).astype(jnp.float32)       # (nb, 1, W*Cp)
    b2l = jnp.stack(b2l).astype(jnp.float32)

    # lane <-> channel selectors for per-channel BN stats (f32 on purpose)
    s1 = jnp.tile(jnp.eye(Chp, dtype=jnp.float32), (W, 1))    # (W*Chp, Chp)
    s2 = jnp.tile(jnp.eye(Cp, dtype=jnp.float32), (W, 1))     # (W*Cp,  Cp)

    # NCHW -> lane-dense NHWC view (N, H, W*Cp); padded channels are zero.
    x = jnp.transpose(x_nchw, (0, 2, 3, 1))
    x = _pad_last(x, Cp).reshape(N, H, W * Cp).astype(jnp.float32)

    out = pl.pallas_call(
        _resblock_group_kernel,
        out_shape=jax.ShapeDtypeStruct((N, H, W * Cp), jnp.float32),
        grid_spec=pltpu.PrefetchScalarGridSpec(
            num_scalar_prefetch=0,
            grid=(1,),
            in_specs=[
                pl.BlockSpec((N, H, W * Cp), lambda i: (0, 0, 0)),            # x
                pl.BlockSpec((nb, 3 * W * Cp, W * Chp), lambda i: (0, 0, 0)), # w1 banded (bf16)
                pl.BlockSpec((nb, 1, W * Chp), lambda i: (0, 0, 0)),          # gamma1 lanes
                pl.BlockSpec((nb, 1, W * Chp), lambda i: (0, 0, 0)),          # beta1 lanes
                pl.BlockSpec((nb, 3 * W * Chp, W * Cp), lambda i: (0, 0, 0)), # w2 banded (bf16)
                pl.BlockSpec((nb, 1, W * Cp), lambda i: (0, 0, 0)),           # gamma2 lanes
                pl.BlockSpec((nb, 1, W * Cp), lambda i: (0, 0, 0)),           # beta2 lanes
                pl.BlockSpec((W * Chp, Chp), lambda i: (0, 0)),               # s1 pool
                pl.BlockSpec((Chp, W * Chp), lambda i: (0, 0)),               # s1 broadcast
                pl.BlockSpec((W * Cp, Cp), lambda i: (0, 0)),                 # s2 pool
                pl.BlockSpec((Cp, W * Cp), lambda i: (0, 0)),                 # s2 broadcast
            ],
            out_specs=pl.BlockSpec((N, H, W * Cp), lambda i: (0, 0, 0)),
            scratch_shapes=[
                pltpu.VMEM((N, HALO_TOP + H + 1, W * Cp), jnp.float32),   # resident activation
                pltpu.VMEM((N, HALO_TOP + H + 1, W * Chp), jnp.bfloat16), # hidden activation
            ],
        ),
        compiler_params=pltpu.CompilerParams(
            dimension_semantics=("arbitrary",),
            # Explicit budget (valid on v5e/v6e/v7x); actual footprint ~2 MiB.
            vmem_limit_bytes=32 * 1024 * 1024),
    )(x, w1b, g1l, b1l, w2b, g2l, b2l, s1, s1.T, s2, s2.T)

    out = out.reshape(N, H, W, Cp)[..., :C]
    return jnp.transpose(out, (0, 3, 1, 2))


def _reference(x_nchw, block_params):
    """Pure-JAX/XLA reference (same train-mode BN semantics), for validation."""
    x = x_nchw
    for p in block_params:
        y = jax.lax.conv_general_dilated(
            x, p["w1"], (1, 1), "SAME",
            dimension_numbers=("NCHW", "HWIO", "NCHW"),
            precision=jax.lax.Precision.HIGHEST)
        mu = jnp.mean(y, axis=(0, 2, 3), keepdims=True)
        var = jnp.mean((y - mu) ** 2, axis=(0, 2, 3), keepdims=True)
        y = jnp.maximum((y - mu) * jax.lax.rsqrt(var + EPS)
                        * p["g1"].reshape(1, -1, 1, 1)
                        + p["beta1"].reshape(1, -1, 1, 1), 0.0)
        z = jax.lax.conv_general_dilated(
            y, p["w2"], (1, 1), "SAME",
            dimension_numbers=("NCHW", "HWIO", "NCHW"),
            precision=jax.lax.Precision.HIGHEST)
        mu2 = jnp.mean(z, axis=(0, 2, 3), keepdims=True)
        var2 = jnp.mean((z - mu2) ** 2, axis=(0, 2, 3), keepdims=True)
        z = jnp.maximum((z - mu2) * jax.lax.rsqrt(var2 + EPS)
                        * p["g2"].reshape(1, -1, 1, 1)
                        + p["beta2"].reshape(1, -1, 1, 1), 0.0)
        x = x + z
    return x


def init_params(key, in_channels, n_blocks, hidden_channels=16):
    """Deterministic synthetic parameters (conv weights in HWIO layout).

    Conv biases are omitted: with train-mode BN immediately after each conv a
    per-channel bias is exactly cancelled by the mean subtraction, so the
    forward output is identical with or without it (NOT valid for eval-mode BN).
    """
    params = []
    for b in range(n_blocks):
        ks = jax.random.split(jax.random.fold_in(key, b), 6)
        params.append(dict(
            # conv1: torch weight (Ch, Cin, 3, 3) stored as HWIO (3, 3, Cin, Ch)
            w1=0.1 * jax.random.normal(ks[0], (3, 3, in_channels, hidden_channels), jnp.float32),
            g1=1.0 + 0.1 * jax.random.normal(ks[1], (1, hidden_channels), jnp.float32),
            beta1=0.05 * jax.random.normal(ks[2], (1, hidden_channels), jnp.float32),
            # conv2: torch weight (Cin, Ch, 3, 3) stored as HWIO (3, 3, Ch, Cin)
            w2=0.1 * jax.random.normal(ks[3], (3, 3, hidden_channels, in_channels), jnp.float32),
            g2=1.0 + 0.1 * jax.random.normal(ks[4], (1, in_channels), jnp.float32),
            beta2=0.05 * jax.random.normal(ks[5], (1, in_channels), jnp.float32),
        ))
    return params


if __name__ == "__main__":
    key = jax.random.PRNGKey(0)
    k_x, k_p = jax.random.split(key)

    N, C, H, W = 2, 4, 16, 16            # batch=2, in_channels=4, spatial=16
    n_blocks, hidden = 2, 16

    x = jax.random.normal(k_x, (N, C, H, W), jnp.float32)   # NCHW, like PyTorch
    block_params = init_params(k_p, in_channels=C, n_blocks=n_blocks,
                               hidden_channels=hidden)

    out = jax.block_until_ready(basic_residual_block_group(x, block_params))
    assert out.shape == (N, C, H, W) and out.dtype == jnp.float32

    ref = jax.block_until_ready(_reference(x, block_params))
    # bf16 MXU operands give ~0.4% relative precision per conv; use a mixed
    # abs/rel criterion against the f32 HIGHEST reference.
    err = float(jnp.max(jnp.abs(out - ref) / (1.0 + jnp.abs(ref))))
    assert err < 5e-2, f"normalized max error vs reference: {err}"

    print("KERNEL_OK")
</pallas_src>

<mosaic_0001>
module attributes {stable_mosaic.version = 11 : i64} {
  func.func @_resblock_group_kernel(%arg0: i32, %arg1: memref<2x16x128xf32, #tpu.memory_space<vmem>>, %arg2: memref<2x384x256xbf16, #tpu.memory_space<vmem>>, %arg3: memref<2x1x256xf32, #tpu.memory_space<vmem>>, %arg4: memref<2x1x256xf32, #tpu.memory_space<vmem>>, %arg5: memref<2x768x128xbf16, #tpu.memory_space<vmem>>, %arg6: memref<2x1x128xf32, #tpu.memory_space<vmem>>, %arg7: memref<2x1x128xf32, #tpu.memory_space<vmem>>, %arg8: memref<256x16xf32, #tpu.memory_space<vmem>>, %arg9: memref<16x256xf32, #tpu.memory_space<vmem>>, %arg10: memref<128x8xf32, #tpu.memory_space<vmem>>, %arg11: memref<8x128xf32, #tpu.memory_space<vmem>>, %arg12: memref<2x16x128xf32, #tpu.memory_space<vmem>>, %arg13: memref<2x25x128xf32, #tpu.memory_space<vmem>>, %arg14: memref<2x25x256xbf16, #tpu.memory_space<vmem>>) attributes {dimension_semantics = [#tpu.dimension_semantics<arbitrary>], iteration_bounds = array<i64: 1>, scalar_prefetch = 0 : i64, scratch_operands = 2 : i64, tpu.core_type = #tpu.core_type<tc>, window_params = [{pipeline_mode = #tpu.pipeline_mode<synchronous>, transform_indices = @transform_0, window_bounds = array<i64: 2, 16, 128>}, {pipeline_mode = #tpu.pipeline_mode<synchronous>, transform_indices = @transform_1, window_bounds = array<i64: 2, 384, 256>}, {pipeline_mode = #tpu.pipeline_mode<synchronous>, transform_indices = @transform_2, window_bounds = array<i64: 2, 1, 256>}, {pipeline_mode = #tpu.pipeline_mode<synchronous>, transform_indices = @transform_3, window_bounds = array<i64: 2, 1, 256>}, {pipeline_mode = #tpu.pipeline_mode<synchronous>, transform_indices = @transform_4, window_bounds = array<i64: 2, 768, 128>}, {pipeline_mode = #tpu.pipeline_mode<synchronous>, transform_indices = @transform_5, window_bounds = array<i64: 2, 1, 128>}, {pipeline_mode = #tpu.pipeline_mode<synchronous>, transform_indices = @transform_6, window_bounds = array<i64: 2, 1, 128>}, {pipeline_mode = #tpu.pipeline_mode<synchronous>, transform_indices = @transform_7, window_bounds = array<i64: 256, 16>}, {pipeline_mode = #tpu.pipeline_mode<synchronous>, transform_indices = @transform_8, window_bounds = array<i64: 16, 256>}, {pipeline_mode = #tpu.pipeline_mode<synchronous>, transform_indices = @transform_9, window_bounds = array<i64: 128, 8>}, {pipeline_mode = #tpu.pipeline_mode<synchronous>, transform_indices = @transform_10, window_bounds = array<i64: 8, 128>}, {pipeline_mode = #tpu.pipeline_mode<synchronous>, transform_indices = @transform_11, window_bounds = array<i64: 2, 16, 128>}]} {
    %cst = arith.constant 0.000000e+00 : f32
    %0 = vector.broadcast %cst : f32 to vector<2x1x128xf32>
    %c0 = arith.constant 0 : index
    %c7 = arith.constant 7 : index
    %c0_0 = arith.constant 0 : index
    %1 = vector.load %arg13[%c0, %c7, %c0_0] : memref<2x25x128xf32, #tpu.memory_space<vmem>>, vector<2x1x128xf32>
    tpu.vector_store %arg13[%c0, %c7, %c0_0], %0 {strides = array<i32>} : memref<2x25x128xf32, #tpu.memory_space<vmem>>, vector<2x1x128xf32>,
    %cst_1 = arith.constant 0.000000e+00 : f32
    %2 = vector.broadcast %cst_1 : f32 to vector<2x1x128xf32>
    %c0_2 = arith.constant 0 : index
    %c24 = arith.constant 24 : index
    %c0_3 = arith.constant 0 : index
    %3 = vector.load %arg13[%c0_2, %c24, %c0_3] : memref<2x25x128xf32, #tpu.memory_space<vmem>>, vector<2x1x128xf32>
    tpu.vector_store %arg13[%c0_2, %c24, %c0_3], %2 {strides = array<i32>} : memref<2x25x128xf32, #tpu.memory_space<vmem>>, vector<2x1x128xf32>,
    %cst_4 = arith.constant 0.000000e+00 : bf16
    %4 = vector.broadcast %cst_4 : bf16 to vector<2x1x256xbf16>
    %c0_5 = arith.constant 0 : index
    %c7_6 = arith.constant 7 : index
    %c0_7 = arith.constant 0 : index
    %5 = vector.load %arg14[%c0_5, %c7_6, %c0_7] : memref<2x25x256xbf16, #tpu.memory_space<vmem>>, vector<2x1x256xbf16>
    tpu.vector_store %arg14[%c0_5, %c7_6, %c0_7], %4 {strides = array<i32>} : memref<2x25x256xbf16, #tpu.memory_space<vmem>>, vector<2x1x256xbf16>,
    %cst_8 = arith.constant 0.000000e+00 : bf16
    %6 = vector.broadcast %cst_8 : bf16 to vector<2x1x256xbf16>
    %c0_9 = arith.constant 0 : index
    %c24_10 = arith.constant 24 : index
    %c0_11 = arith.constant 0 : index
    %7 = vector.load %arg14[%c0_9, %c24_10, %c0_11] : memref<2x25x256xbf16, #tpu.memory_space<vmem>>, vector<2x1x256xbf16>
    tpu.vector_store %arg14[%c0_9, %c24_10, %c0_11], %6 {strides = array<i32>} : memref<2x25x256xbf16, #tpu.memory_space<vmem>>, vector<2x1x256xbf16>,
    %c0_12 = arith.constant 0 : index
    %c0_13 = arith.constant 0 : index
    %c0_14 = arith.constant 0 : index
    %8 = vector.load %arg1[%c0_12, %c0_13, %c0_14] : memref<2x16x128xf32, #tpu.memory_space<vmem>>, vector<2x16x128xf32>
    %c0_15 = arith.constant 0 : index
    %c8 = arith.constant 8 : index
    %c0_16 = arith.constant 0 : index
    %9 = vector.load %arg13[%c0_15, %c8, %c0_16] : memref<2x25x128xf32, #tpu.memory_space<vmem>>, vector<2x16x128xf32>
    tpu.vector_store %arg13[%c0_15, %c8, %c0_16], %8 {strides = array<i32>} : memref<2x25x128xf32, #tpu.memory_space<vmem>>, vector<2x16x128xf32>,
    %c0_i32 = arith.constant 0 : i32
    %c2_i32 = arith.constant 2 : i32
    %10 = arith.addi %c0_i32, %c2_i32 : i32
    %c1_i32 = arith.constant 1 : i32
    scf.for %arg15 = %c0_i32 to %10 step %c1_i32  : i32 {
      %c1_i32_24 = arith.constant 1 : i32
      %13 = arith.muli %arg15, %c1_i32_24 : i32
      %c0_i32_25 = arith.constant 0 : i32
      %14 = arith.addi %c0_i32_25, %13 : i32
      %15 = arith.index_cast %14 : i32 to index
      %c0_26 = arith.constant 0 : index
      %c0_27 = arith.constant 0 : index
      %16 = vector.load %arg2[%15, %c0_26, %c0_27] : memref<2x384x256xbf16, #tpu.memory_space<vmem>>, vector<1x384x256xbf16>
      %17 = vector.shape_cast %16 : vector<1x384x256xbf16> to vector<384x256xbf16>
      %c0_28 = arith.constant 0 : index
      %c7_29 = arith.constant 7 : index
      %c0_30 = arith.constant 0 : index
      %18 = vector.load %arg13[%c0_28, %c7_29, %c0_30] : memref<2x25x128xf32, #tpu.memory_space<vmem>>, vector<2x16x128xf32>
      %19 = vector.shape_cast %18 : vector<2x16x128xf32> to vector<32x128xf32>
      %20 = arith.truncf %19 : vector<32x128xf32> to vector<32x128xbf16>
      %c0_31 = arith.constant 0 : index
      %c8_32 = arith.constant 8 : index
      %c0_33 = arith.constant 0 : index
      %21 = vector.load %arg13[%c0_31, %c8_32, %c0_33] : memref<2x25x128xf32, #tpu.memory_space<vmem>>, vector<2x16x128xf32>
      %22 = vector.shape_cast %21 : vector<2x16x128xf32> to vector<32x128xf32>
      %23 = arith.truncf %22 : vector<32x128xf32> to vector<32x128xbf16>
      %c0_34 = arith.constant 0 : index
      %c9 = arith.constant 9 : index
      %c0_35 = arith.constant 0 : index
      %24 = vector.load %arg13[%c0_34, %c9, %c0_35] : memref<2x25x128xf32, #tpu.memory_space<vmem>>, vector<2x16x128xf32>
      %25 = vector.shape_cast %24 : vector<2x16x128xf32> to vector<32x128xf32>
      %26 = arith.truncf %25 : vector<32x128xf32> to vector<32x128xbf16>
      %27 = tpu.concatenate %20, %23, %26 in 1 : vector<32x128xbf16>, vector<32x128xbf16>, vector<32x128xbf16> -> vector<32x384xbf16>
      %cst_36 = arith.constant dense<0.000000e+00> : vector<32x256xf32>
      %28 = tpu.matmul %27, %17, %cst_36 {dimension_numbers = #tpu.dot_dimension_numbers<[1], [0], [0], [1], [0, 0, 1, 1], [], []>} : vector<32x384xbf16>, vector<384x256xbf16>, vector<32x256xf32> -> vector<32x256xf32>
      %29 = arith.index_cast %14 : i32 to index
      %c0_37 = arith.constant 0 : index
      %c0_38 = arith.constant 0 : index
      %30 = vector.load %arg3[%29, %c0_37, %c0_38] : memref<2x1x256xf32, #tpu.memory_space<vmem>>, vector<1x1x256xf32>
      %31 = vector.shape_cast %30 : vector<1x1x256xf32> to vector<1x256xf32>
      %32 = arith.index_cast %14 : i32 to index
      %c0_39 = arith.constant 0 : index
      %c0_40 = arith.constant 0 : index
      %33 = vector.load %arg4[%32, %c0_39, %c0_40] : memref<2x1x256xf32, #tpu.memory_space<vmem>>, vector<1x1x256xf32>
      %34 = vector.shape_cast %33 : vector<1x1x256xf32> to vector<1x256xf32>
      %cst_41 = arith.constant dense<0.000000e+00> : vector<256xf32>
      %35 = vector.multi_reduction <add>, %28, %cst_41 [0] : vector<32x256xf32> to vector<256xf32>
      %36 = vector.shape_cast %35 : vector<256xf32> to vector<1x256xf32>
      %37 = arith.mulf %28, %28 : vector<32x256xf32>
      %cst_42 = arith.constant dense<0.000000e+00> : vector<256xf32>
      %38 = vector.multi_reduction <add>, %37, %cst_42 [0] : vector<32x256xf32> to vector<256xf32>
      %39 = vector.shape_cast %38 : vector<256xf32> to vector<1x256xf32>
      %40 = tpu.concatenate %36, %39 in 0 : vector<1x256xf32>, vector<1x256xf32> -> vector<2x256xf32>
      %c0_43 = arith.constant 0 : index
      %c0_44 = arith.constant 0 : index
      %41 = vector.load %arg8[%c0_43, %c0_44] : memref<256x16xf32, #tpu.memory_space<vmem>>, vector<256x16xf32>
      %cst_45 = arith.constant dense<0.000000e+00> : vector<2x16xf32>
      %42 = tpu.matmul %40, %41, %cst_45 {dimension_numbers = #tpu.dot_dimension_numbers<[1], [0], [0], [1], [0, 0, 1, 1], [], []>} : vector<2x256xf32>, vector<256x16xf32>, vector<2x16xf32> -> vector<2x16xf32>
      %cst_46 = arith.constant 0.001953125 : f32
      %43 = vector.broadcast %cst_46 : f32 to vector<2x16xf32>
      %44 = arith.mulf %42, %43 : vector<2x16xf32>
      %45 = vector.extract_strided_slice %44 {offsets = [0, 0], sizes = [1, 16], strides = [1, 1]} : vector<2x16xf32> to vector<1x16xf32>
      %46 = vector.extract_strided_slice %44 {offsets = [1, 0], sizes = [1, 16], strides = [1, 1]} : vector<2x16xf32> to vector<1x16xf32>
      %47 = arith.mulf %45, %45 : vector<1x16xf32>
      %48 = arith.subf %46, %47 : vector<1x16xf32>
      %49 = tpu.concatenate %45, %48 in 0 : vector<1x16xf32>, vector<1x16xf32> -> vector<2x16xf32>
      %c0_47 = arith.constant 0 : index
      %c0_48 = arith.constant 0 : index
      %50 = vector.load %arg9[%c0_47, %c0_48] : memref<16x256xf32, #tpu.memory_space<vmem>>, vector<16x256xf32>
      %cst_49 = arith.constant dense<0.000000e+00> : vector<2x256xf32>
      %51 = tpu.matmul %49, %50, %cst_49 {dimension_numbers = #tpu.dot_dimension_numbers<[1], [0], [0], [1], [0, 0, 1, 1], [], []>} : vector<2x16xf32>, vector<16x256xf32>, vector<2x256xf32> -> vector<2x256xf32>
      %52 = vector.extract_strided_slice %51 {offsets = [1, 0], sizes = [1, 256], strides = [1, 1]} : vector<2x256xf32> to vector<1x256xf32>
      %cst_50 = arith.constant 9.99999974E-6 : f32
      %53 = vector.broadcast %cst_50 : f32 to vector<1x256xf32>
      %54 = arith.addf %52, %53 : vector<1x256xf32>
      %55 = math.rsqrt %54 : vector<1x256xf32>
      %56 = arith.mulf %31, %55 : vector<1x256xf32>
      %57 = vector.extract_strided_slice %51 {offsets = [0, 0], sizes = [1, 256], strides = [1, 1]} : vector<2x256xf32> to vector<1x256xf32>
      %58 = vector.broadcast %57 : vector<1x256xf32> to vector<32x256xf32>
      %59 = arith.subf %28, %58 : vector<32x256xf32>
      %60 = vector.broadcast %56 : vector<1x256xf32> to vector<32x256xf32>
      %61 = arith.mulf %59, %60 : vector<32x256xf32>
      %62 = vector.broadcast %34 : vector<1x256xf32> to vector<32x256xf32>
      %63 = arith.addf %61, %62 : vector<32x256xf32>
      %cst_51 = arith.constant 0.000000e+00 : f32
      %64 = vector.broadcast %cst_51 : f32 to vector<32x256xf32>
      %65 = arith.maximumf %63, %64 : vector<32x256xf32>
      %66 = vector.shape_cast %65 : vector<32x256xf32> to vector<2x16x256xf32>
      %67 = arith.truncf %66 : vector<2x16x256xf32> to vector<2x16x256xbf16>
      %c0_52 = arith.constant 0 : index
      %c8_53 = arith.constant 8 : index
      %c0_54 = arith.constant 0 : index
      %68 = vector.load %arg14[%c0_52, %c8_53, %c0_54] : memref<2x25x256xbf16, #tpu.memory_space<vmem>>, vector<2x16x256xbf16>
      tpu.vector_store %arg14[%c0_52, %c8_53, %c0_54], %67 {strides = array<i32>} : memref<2x25x256xbf16, #tpu.memory_space<vmem>>, vector<2x16x256xbf16>,
      %69 = arith.index_cast %14 : i32 to index
      %c0_55 = arith.constant 0 : index
      %c0_56 = arith.constant 0 : index
      %70 = vector.load %arg5[%69, %c0_55, %c0_56] : memref<2x768x128xbf16, #tpu.memory_space<vmem>>, vector<1x768x128xbf16>
      %71 = vector.shape_cast %70 : vector<1x768x128xbf16> to vector<768x128xbf16>
      %c0_57 = arith.constant 0 : index
      %c7_58 = arith.constant 7 : index
      %c0_59 = arith.constant 0 : index
      %72 = vector.load %arg14[%c0_57, %c7_58, %c0_59] : memref<2x25x256xbf16, #tpu.memory_space<vmem>>, vector<2x16x256xbf16>
      %73 = vector.shape_cast %72 : vector<2x16x256xbf16> to vector<32x256xbf16>
      %c0_60 = arith.constant 0 : index
      %c8_61 = arith.constant 8 : index
      %c0_62 = arith.constant 0 : index
      %74 = vector.load %arg14[%c0_60, %c8_61, %c0_62] : memref<2x25x256xbf16, #tpu.memory_space<vmem>>, vector<2x16x256xbf16>
      %75 = vector.shape_cast %74 : vector<2x16x256xbf16> to vector<32x256xbf16>
      %c0_63 = arith.constant 0 : index
      %c9_64 = arith.constant 9 : index
      %c0_65 = arith.constant 0 : index
      %76 = vector.load %arg14[%c0_63, %c9_64, %c0_65] : memref<2x25x256xbf16, #tpu.memory_space<vmem>>, vector<2x16x256xbf16>
      %77 = vector.shape_cast %76 : vector<2x16x256xbf16> to vector<32x256xbf16>
      %78 = tpu.concatenate %73, %75, %77 in 1 : vector<32x256xbf16>, vector<32x256xbf16>, vector<32x256xbf16> -> vector<32x768xbf16>
      %cst_66 = arith.constant dense<0.000000e+00> : vector<32x128xf32>
      %79 = tpu.matmul %78, %71, %cst_66 {dimension_numbers = #tpu.dot_dimension_numbers<[1], [0], [0], [1], [0, 0, 1, 1], [], []>} : vector<32x768xbf16>, vector<768x128xbf16>, vector<32x128xf32> -> vector<32x128xf32>
      %80 = arith.index_cast %14 : i32 to index
      %c0_67 = arith.constant 0 : index
      %c0_68 = arith.constant 0 : index
      %81 = vector.load %arg6[%80, %c0_67, %c0_68] : memref<2x1x128xf32, #tpu.memory_space<vmem>>, vector<1x1x128xf32>
      %82 = vector.shape_cast %81 : vector<1x1x128xf32> to vector<1x128xf32>
      %83 = arith.index_cast %14 : i32 to index
      %c0_69 = arith.constant 0 : index
      %c0_70 = arith.constant 0 : index
      %84 = vector.load %arg7[%83, %c0_69, %c0_70] : memref<2x1x128xf32, #tpu.memory_space<vmem>>, vector<1x1x128xf32>
      %85 = vector.shape_cast %84 : vector<1x1x128xf32> to vector<1x128xf32>
      %cst_71 = arith.constant dense<0.000000e+00> : vector<128xf32>
      %86 = vector.multi_reduction <add>, %79, %cst_71 [0] : vector<32x128xf32> to vector<128xf32>
      %87 = vector.shape_cast %86 : vector<128xf32> to vector<1x128xf32>
      %88 = arith.mulf %79, %79 : vector<32x128xf32>
      %cst_72 = arith.constant dense<0.000000e+00> : vector<128xf32>
      %89 = vector.multi_reduction <add>, %88, %cst_72 [0] : vector<32x128xf32> to vector<128xf32>
      %90 = vector.shape_cast %89 : vector<128xf32> to vector<1x128xf32>
      %91 = tpu.concatenate %87, %90 in 0 : vector<1x128xf32>, vector<1x128xf32> -> vector<2x128xf32>
      %c0_73 = arith.constant 0 : index
      %c0_74 = arith.constant 0 : index
      %92 = vector.load %arg10[%c0_73, %c0_74] : memref<128x8xf32, #tpu.memory_space<vmem>>, vector<128x8xf32>
      %cst_75 = arith.constant dense<0.000000e+00> : vector<2x8xf32>
      %93 = tpu.matmul %91, %92, %cst_75 {dimension_numbers = #tpu.dot_dimension_numbers<[1], [0], [0], [1], [0, 0, 1, 1], [], []>} : vector<2x128xf32>, vector<128x8xf32>, vector<2x8xf32> -> vector<2x8xf32>
      %cst_76 = arith.constant 0.001953125 : f32
      %94 = vector.broadcast %cst_76 : f32 to vector<2x8xf32>
      %95 = arith.mulf %93, %94 : vector<2x8xf32>
      %96 = vector.extract_strided_slice %95 {offsets = [0, 0], sizes = [1, 8], strides = [1, 1]} : vector<2x8xf32> to vector<1x8xf32>
      %97 = vector.extract_strided_slice %95 {offsets = [1, 0], sizes = [1, 8], strides = [1, 1]} : vector<2x8xf32> to vector<1x8xf32>
      %98 = arith.mulf %96, %96 : vector<1x8xf32>
      %99 = arith.subf %97, %98 : vector<1x8xf32>
      %100 = tpu.concatenate %96, %99 in 0 : vector<1x8xf32>, vector<1x8xf32> -> vector<2x8xf32>
      %c0_77 = arith.constant 0 : index
      %c0_78 = arith.constant 0 : index
      %101 = vector.load %arg11[%c0_77, %c0_78] : memref<8x128xf32, #tpu.memory_space<vmem>>, vector<8x128xf32>
      %cst_79 = arith.constant dense<0.000000e+00> : vector<2x128xf32>
      %102 = tpu.matmul %100, %101, %cst_79 {dimension_numbers = #tpu.dot_dimension_numbers<[1], [0], [0], [1], [0, 0, 1, 1], [], []>} : vector<2x8xf32>, vector<8x128xf32>, vector<2x128xf32> -> vector<2x128xf32>
      %103 = vector.extract_strided_slice %102 {offsets = [1, 0], sizes = [1, 128], strides = [1, 1]} : vector<2x128xf32> to vector<1x128xf32>
      %cst_80 = arith.constant 9.99999974E-6 : f32
      %104 = vector.broadcast %cst_80 : f32 to vector<1x128xf32>
      %105 = arith.addf %103, %104 : vector<1x128xf32>
      %106 = math.rsqrt %105 : vector<1x128xf32>
      %107 = arith.mulf %82, %106 : vector<1x128xf32>
      %108 = vector.extract_strided_slice %102 {offsets = [0, 0], sizes = [1, 128], strides = [1, 1]} : vector<2x128xf32> to vector<1x128xf32>
      %109 = vector.broadcast %108 : vector<1x128xf32> to vector<32x128xf32>
      %110 = arith.subf %79, %109 : vector<32x128xf32>
      %111 = vector.broadcast %107 : vector<1x128xf32> to vector<32x128xf32>
      %112 = arith.mulf %110, %111 : vector<32x128xf32>
      %113 = vector.broadcast %85 : vector<1x128xf32> to vector<32x128xf32>
      %114 = arith.addf %112, %113 : vector<32x128xf32>
      %cst_81 = arith.constant 0.000000e+00 : f32
      %115 = vector.broadcast %cst_81 : f32 to vector<32x128xf32>
      %116 = arith.maximumf %114, %115 : vector<32x128xf32>
      %c0_82 = arith.constant 0 : index
      %c8_83 = arith.constant 8 : index
      %c0_84 = arith.constant 0 : index
      %117 = vector.load %arg13[%c0_82, %c8_83, %c0_84] : memref<2x25x128xf32, #tpu.memory_space<vmem>>, vector<2x16x128xf32>
      %118 = vector.shape_cast %116 : vector<32x128xf32> to vector<2x16x128xf32>
      %119 = arith.addf %117, %118 : vector<2x16x128xf32>
      %c0_85 = arith.constant 0 : index
      %c8_86 = arith.constant 8 : index
      %c0_87 = arith.constant 0 : index
      %120 = vector.load %arg13[%c0_85, %c8_86, %c0_87] : memref<2x25x128xf32, #tpu.memory_space<vmem>>, vector<2x16x128xf32>
      tpu.vector_store %arg13[%c0_85, %c8_86, %c0_87], %119 {strides = array<i32>} : memref<2x25x128xf32, #tpu.memory_space<vmem>>, vector<2x16x128xf32>,
    }
    %c2_i32_17 = arith.constant 2 : i32
    %c0_18 = arith.constant 0 : index
    %c8_19 = arith.constant 8 : index
    %c0_20 = arith.constant 0 : index
    %11 = vector.load %arg13[%c0_18, %c8_19, %c0_20] : memref<2x25x128xf32, #tpu.memory_space<vmem>>, vector<2x16x128xf32>
    %c0_21 = arith.constant 0 : index
    %c0_22 = arith.constant 0 : index
    %c0_23 = arith.constant 0 : index
    %12 = vector.load %arg12[%c0_21, %c0_22, %c0_23] : memref<2x16x128xf32, #tpu.memory_space<vmem>>, vector<2x16x128xf32>
    tpu.vector_store %arg12[%c0_21, %c0_22, %c0_23], %11 {strides = array<i32>} : memref<2x16x128xf32, #tpu.memory_space<vmem>>, vector<2x16x128xf32>,
    return
  }
  func.func @transform_0(%arg0: i32) -> (i32, i32, i32) {
    %c0_i32 = arith.constant 0 : i32
    %c0_i32_0 = arith.constant 0 : i32
    %c0_i32_1 = arith.constant 0 : i32
    %c0_i32_2 = arith.constant 0 : i32
    return %c0_i32, %c0_i32_0, %c0_i32_1 : i32, i32, i32
  }
  func.func @transform_1(%arg0: i32) -> (i32, i32, i32) {
    %c0_i32 = arith.constant 0 : i32
    %c0_i32_0 = arith.constant 0 : i32
    %c0_i32_1 = arith.constant 0 : i32
    %c0_i32_2 = arith.constant 0 : i32
    return %c0_i32, %c0_i32_0, %c0_i32_1 : i32, i32, i32
  }
  func.func @transform_2(%arg0: i32) -> (i32, i32, i32) {
    %c0_i32 = arith.constant 0 : i32
    %c0_i32_0 = arith.constant 0 : i32
    %c0_i32_1 = arith.constant 0 : i32
    %c0_i32_2 = arith.constant 0 : i32
    return %c0_i32, %c0_i32_0, %c0_i32_1 : i32, i32, i32
  }
  func.func @transform_3(%arg0: i32) -> (i32, i32, i32) {
    %c0_i32 = arith.constant 0 : i32
    %c0_i32_0 = arith.constant 0 : i32
    %c0_i32_1 = arith.constant 0 : i32
    %c0_i32_2 = arith.constant 0 : i32
    return %c0_i32, %c0_i32_0, %c0_i32_1 : i32, i32, i32
  }
  func.func @transform_4(%arg0: i32) -> (i32, i32, i32) {
    %c0_i32 = arith.constant 0 : i32
    %c0_i32_0 = arith.constant 0 : i32
    %c0_i32_1 = arith.constant 0 : i32
    %c0_i32_2 = arith.constant 0 : i32
    return %c0_i32, %c0_i32_0, %c0_i32_1 : i32, i32, i32
  }
  func.func @transform_5(%arg0: i32) -> (i32, i32, i32) {
    %c0_i32 = arith.constant 0 : i32
    %c0_i32_0 = arith.constant 0 : i32
    %c0_i32_1 = arith.constant 0 : i32
    %c0_i32_2 = arith.constant 0 : i32
    return %c0_i32, %c0_i32_0, %c0_i32_1 : i32, i32, i32
  }
  func.func @transform_6(%arg0: i32) -> (i32, i32, i32) {
    %c0_i32 = arith.constant 0 : i32
    %c0_i32_0 = arith.constant 0 : i32
    %c0_i32_1 = arith.constant 0 : i32
    %c0_i32_2 = arith.constant 0 : i32
    return %c0_i32, %c0_i32_0, %c0_i32_1 : i32, i32, i32
  }
  func.func @transform_7(%arg0: i32) -> (i32, i32) {
    %c0_i32 = arith.constant 0 : i32
    %c0_i32_0 = arith.constant 0 : i32
    %c0_i32_1 = arith.constant 0 : i32
    return %c0_i32, %c0_i32_0 : i32, i32
  }
  func.func @transform_8(%arg0: i32) -> (i32, i32) {
    %c0_i32 = arith.constant 0 : i32
    %c0_i32_0 = arith.constant 0 : i32
    %c0_i32_1 = arith.constant 0 : i32
    return %c0_i32, %c0_i32_0 : i32, i32
  }
  func.func @transform_9(%arg0: i32) -> (i32, i32) {
    %c0_i32 = arith.constant 0 : i32
    %c0_i32_0 = arith.constant 0 : i32
    %c0_i32_1 = arith.constant 0 : i32
    return %c0_i32, %c0_i32_0 : i32, i32
  }
  func.func @transform_10(%arg0: i32) -> (i32, i32) {
    %c0_i32 = arith.constant 0 : i32
    %c0_i32_0 = arith.constant 0 : i32
    %c0_i32_1 = arith.constant 0 : i32
    return %c0_i32, %c0_i32_0 : i32, i32
  }
  func.func @transform_11(%arg0: i32) -> (i32, i32, i32) {
    %c0_i32 = arith.constant 0 : i32
    %c0_i32_0 = arith.constant 0 : i32
    %c0_i32_1 = arith.constant 0 : i32
    %c0_i32_2 = arith.constant 0 : i32
    return %c0_i32, %c0_i32_0, %c0_i32_1 : i32, i32, i32
  }
}

</mosaic_0001>

<llo_original>
// kernel: tpu_custom_call.1
$region0: #{tpu_custom_call.1}
  #allocation0 [shape = 'u32[]', space=smem, size = 0x4, offset = 0x4, fixed_abs, tag = 'smem constant byte address 0x4 - core index']
  #allocation1 [shape = 'u32[72,128]{1,0:T(1,128)}', space=vmem, size = 0x9000, scoped, tag = 'internal scratch']
  #allocation2 [shape = 'f32[2,25,128]{2,1,0:T(8,128)}', space=vmem, size = 0x8000, scoped, tag = 'scratch operand']
  #allocation3 [shape = 'bf16[2,25,256]{2,1,0:T(8,128)(2,1)}', space=vmem, size = 0x8000, scoped, tag = 'scratch operand']
  %s0 = inlined_call_operand.vmem [shape: f32[2,16,128], index: 0, kind: input, shape index: {}]
  %s1 = inlined_call_operand.hbm [shape: bf16[2,384,256], index: 1, kind: input, shape index: {}]
  %s2 = inlined_call_operand.vmem [shape: f32[2,1,256], index: 2, kind: input, shape index: {}]
  %s3 = inlined_call_operand.vmem [shape: f32[2,1,256], index: 3, kind: input, shape index: {}]
  %s4 = inlined_call_operand.hbm [shape: bf16[2,768,128], index: 4, kind: input, shape index: {}]
  %s5 = inlined_call_operand.vmem [shape: f32[2,1,128], index: 5, kind: input, shape index: {}]
  %s6 = inlined_call_operand.vmem [shape: f32[2,1,128], index: 6, kind: input, shape index: {}]
  %s7 = inlined_call_operand.vmem [shape: f32[256,16], index: 7, kind: input, shape index: {}]
  %s8 = inlined_call_operand.vmem [shape: f32[16,256], index: 8, kind: input, shape index: {}]
  %s9 = inlined_call_operand.vmem [shape: f32[128,8], index: 9, kind: input, shape index: {}]
  %s10 = inlined_call_operand.vmem [shape: f32[8,128], index: 10, kind: input, shape index: {}]
  %s11 = inlined_call_operand.hbm [shape: f32[2,16,128], index: 11, kind: output, shape index: {}]
  %s12 = sld [smem:[#allocation0]]
  $region69: #{tpu_custom_call.1} parent=0
    _
  %s14 = ssub.s32 1, %s12
  %s15 = scalar_select 0, %s14, %s12
  $region1: #{tpu_custom_call.1} parent=0
    #allocation4 [shape = 'u8[393216]{0}', space=vmem, size = 0x60000, scoped, tag = 'input window, operand 1, single buffered']
    #allocation5 [shape = 's32[1]{0}', space=sflag, size = 0x4, scoped, tag = 'scoped memory for tpu_custom_call.1']
    #allocation6 [shape = 's32[1]{0}', space=sflag, size = 0x4, scoped, tag = 'scoped memory for tpu_custom_call.1']
    #allocation7 [shape = 'u8[393216]{0}', space=vmem, size = 0x60000, scoped, tag = 'input window, operand 4, single buffered']
    #allocation8 [shape = 's32[1]{0}', space=sflag, size = 0x4, scoped, tag = 'scoped memory for tpu_custom_call.1']
    #allocation9 [shape = 'u8[16384]{0}', space=vmem, size = 0x4000, scoped, tag = 'output window, operand 0, single buffered']
    %16 = vsyncpa [#allocation5], 0
    %17 = vsyncpa [#allocation8], 0
    %18 = vsyncpa [#allocation6], 0
    // Predicated region
    $region2: #{tpu_custom_call.1} parent=1 // pred_check
      _
    $region3: #{tpu_custom_call.1} parent=1 // pred_check_branch
      %20 = sbr.rel (0) target = $region5
    $region4: #{tpu_custom_call.1} parent=1 // pred_region
      _
    $region5: #{tpu_custom_call.1} parent=1 // pred_fallthru
      _
    // Predicated region
    $region6: #{tpu_custom_call.1} parent=1 // pred_check
      _
    $region7: #{tpu_custom_call.1} parent=1 // pred_check_branch
      %22 = sbr.rel (0) target = $region9
    $region8: #{tpu_custom_call.1} parent=1 // pred_region
      %24 = vsyncadd [#allocation5], 0
      %s25 = sshll.u32 %s1, 4
      %s26 = int_to_ptr.hbm [resolvable:$true] %s25
      %s27 = sshll.u32 [#allocation4], 4
      %s28 = int_to_ptr.vmem [resolvable:$true] %s27
      %33 = dma.hbm_to_vmem [thread:$0]  %s26, 12288, %s28, [#allocation5], 128, 128, 8
    $region9: #{tpu_custom_call.1} parent=1 // pred_fallthru
      _
    // Predicated region
    $region10: #{tpu_custom_call.1} parent=1 // pred_check
      _
    $region11: #{tpu_custom_call.1} parent=1 // pred_check_branch
      %35 = sbr.rel (0) target = $region13
    $region12: #{tpu_custom_call.1} parent=1 // pred_region
      _
    $region13: #{tpu_custom_call.1} parent=1 // pred_fallthru
      _
    // Predicated region
    $region14: #{tpu_custom_call.1} parent=1 // pred_check
      _
    $region15: #{tpu_custom_call.1} parent=1 // pred_check_branch
      %37 = sbr.rel (0) target = $region17
    $region16: #{tpu_custom_call.1} parent=1 // pred_region
      _
    $region17: #{tpu_custom_call.1} parent=1 // pred_fallthru
      _
    // Predicated region
    $region18: #{tpu_custom_call.1} parent=1 // pred_check
      _
    $region19: #{tpu_custom_call.1} parent=1 // pred_check_branch
      %39 = sbr.rel (0) target = $region21
    $region20: #{tpu_custom_call.1} parent=1 // pred_region
      %41 = vsyncadd [#allocation8], 0
      %s42 = sshll.u32 %s4, 4
      %s43 = int_to_ptr.hbm [resolvable:$true] %s42
      %s44 = sshll.u32 [#allocation7], 4
      %s45 = int_to_ptr.vmem [resolvable:$true] %s44
      %50 = dma.hbm_to_vmem [thread:$0]  %s43, 12288, %s45, [#allocation8], 64, 64, 4
    $region21: #{tpu_custom_call.1} parent=1 // pred_fallthru
      _
    // Predicated region
    $region22: #{tpu_custom_call.1} parent=1 // pred_check
      _
    $region23: #{tpu_custom_call.1} parent=1 // pred_check_branch
      %52 = sbr.rel (0) target = $region25
    $region24: #{tpu_custom_call.1} parent=1 // pred_region
      _
    $region25: #{tpu_custom_call.1} parent=1 // pred_fallthru
      _
    // Predicated region
    $region26: #{tpu_custom_call.1} parent=1 // pred_check
      _
    $region27: #{tpu_custom_call.1} parent=1 // pred_check_branch
      %54 = sbr.rel (0) target = $region29
    $region28: #{tpu_custom_call.1} parent=1 // pred_region
      _
    $region29: #{tpu_custom_call.1} parent=1 // pred_fallthru
      _
    // Predicated region
    $region30: #{tpu_custom_call.1} parent=1 // pred_check
      _
    $region31: #{tpu_custom_call.1} parent=1 // pred_check_branch
      %56 = sbr.rel (0) target = $region33
    $region32: #{tpu_custom_call.1} parent=1 // pred_region
      _
    $region33: #{tpu_custom_call.1} parent=1 // pred_fallthru
      _
    // Predicated region
    $region34: #{tpu_custom_call.1} parent=1 // pred_check
      _
    $region35: #{tpu_custom_call.1} parent=1 // pred_check_branch
      %58 = sbr.rel (0) target = $region37
    $region36: #{tpu_custom_call.1} parent=1 // pred_region
      _
    $region37: #{tpu_custom_call.1} parent=1 // pred_fallthru
      _
    // Predicated region
    $region38: #{tpu_custom_call.1} parent=1 // pred_check
      _
    $region39: #{tpu_custom_call.1} parent=1 // pred_check_branch
      %60 = sbr.rel (0) target = $region41
    $region40: #{tpu_custom_call.1} parent=1 // pred_region
      _
    $region41: #{tpu_custom_call.1} parent=1 // pred_fallthru
      _
    // Predicated region
    $region42: #{tpu_custom_call.1} parent=1 // pred_check
      _
    $region43: #{tpu_custom_call.1} parent=1 // pred_check_branch
      %62 = sbr.rel (0) target = $region45
    $region44: #{tpu_custom_call.1} parent=1 // pred_region
      _
    $region45: #{tpu_custom_call.1} parent=1 // pred_fallthru
      _
    // Predicated region
    $region46: #{tpu_custom_call.1} parent=1 // pred_check
      _
    $region47: #{tpu_custom_call.1} parent=1 // pred_check_branch
      %64 = sbr.rel (0) target = $region49
    $region48: #{tpu_custom_call.1} parent=1 // pred_region
      %66 = dma.done [#allocation5], 12288
    $region49: #{tpu_custom_call.1} parent=1 // pred_fallthru
      _
    // Predicated region
    $region50: #{tpu_custom_call.1} parent=1 // pred_check
      _
    $region51: #{tpu_custom_call.1} parent=1 // pred_check_branch
      %68 = sbr.rel (0) target = $region53
    $region52: #{tpu_custom_call.1} parent=1 // pred_region
      %70 = dma.done [#allocation8], 12288
    $region53: #{tpu_custom_call.1} parent=1 // pred_fallthru
      _
    %72 = vst [vmem:[#allocation2 + $0x7] sm:$0x1] 0.0
    %73 = vst [vmem:[#allocation2 + $0x27] sm:$0x1] 0.0
    %74 = vst [vmem:[#allocation2 + $0x18] sm:$0x1] 0.0
    %75 = vst [vmem:[#allocation2 + $0x38] sm:$0x1] 0.0
    %vm76 = vcmask 1043459
    %vm77 = vsmask.f32 7950
    %vm78 = vmand %vm76, %vm77
    %vm79 = vcmask 1047559
    %vm80 = vsmask.f32 7966
    %vm81 = vmand %vm79, %vm80
    %vm82 = vmor %vm81, %vm78
    %v83 = vld [vmem:[#allocation3] sm:$0x88]
    %v84 = vsel %vm82, 0, %v83
    %85 = vst [vmem:[#allocation3] sm:$0x88] %v84
    %v86 = vld [vmem:[#allocation3 + $0x20] sm:$0x88]
    %v87 = vsel %vm82, 0, %v86
    %88 = vst [vmem:[#allocation3 + $0x20] sm:$0x88] %v87
    %vm89 = vcmask 1040384
    %vm90 = vsmask.f32 256
    %vm91 = vmand %vm89, %vm90
    %vm92 = vcmask 1044484
    %vm93 = vsmask.f32 4352
    %vm94 = vmand %vm92, %vm93
    %vm95 = vmor %vm94, %vm91
    %v96 = vld [vmem:[#allocation3 + $0x18] sm:$0x11]
    %v97 = vsel %vm95, 0, %v96
    %98 = vst [vmem:[#allocation3 + $0x18] sm:$0x11] %v97
    %v99 = vld [vmem:[#allocation3 + $0x38] sm:$0x11]
    %v100 = vsel %vm95, 0, %v99
    %101 = vst [vmem:[#allocation3 + $0x38] sm:$0x11] %v100
    %v102 = vld [vmem:[%s0] sm:$0xff]
    %v103 = vld [vmem:[%s0 + $0x8] sm:$0xff]
    %v104 = vld [vmem:[%s0 + $0x10] sm:$0xff]
    %v105 = vld [vmem:[%s0 + $0x18] sm:$0xff]
    %106 = vst [vmem:[#allocation2 + $0x8] sm:$0xff] %v102
    %107 = vst [vmem:[#allocation2 + $0x10] sm:$0xff] %v103
    %108 = vst [vmem:[#allocation2 + $0x28] sm:$0xff] %v104
    %109 = vst [vmem:[#allocation2 + $0x30] sm:$0xff] %v105
    loop: start=0, step=1, limit=2
    $region54: #{tpu_custom_call.1} parent=1 // loop_pre_header
      _
    $region55: #{tpu_custom_call.1} parent=1 // loop_header
      %s111 = sphi 0, %s115
      %p112 = scmp.ge.s32.totalorder %s111, 2
    $region56: #{tpu_custom_call.1} parent=1 // loop_header_branch
      %114 = sbr.rel (%p112) target = $region60
    $region57: #{tpu_custom_call.1} parent=1 // loop_body
      %s116 = smul.u32 %s111, 96
      %s117 = smul.addr %s116, 4
      %s118 = scalar_lea.vmem [#allocation4], %s117
      %v119 = vld [vmem:[%s118] sm:$0xff]
      %v120 = vld [vmem:[%s118 + $0x8] sm:$0xff]
      %v121 = vld [vmem:[%s118 + $0x10] sm:$0xff]
      %v122 = vld [vmem:[%s118 + $0x18] sm:$0xff]
      %v123 = vld [vmem:[%s118 + $0x20] sm:$0xff]
      %v124 = vld [vmem:[%s118 + $0x28] sm:$0xff]
      %v125 = vld [vmem:[%s118 + $0x30] sm:$0xff]
      %v126 = vld [vmem:[%s118 + $0x38] sm:$0xff]
      %v127 = vld [vmem:[%s118 + $0x40] sm:$0xff]
      %v128 = vld [vmem:[%s118 + $0x48] sm:$0xff]
      %v129 = vld [vmem:[%s118 + $0x50] sm:$0xff]
      %v130 = vld [vmem:[%s118 + $0x58] sm:$0xff]
      %v131 = vld [vmem:[%s118 + $0x60] sm:$0xff]
      %v132 = vld [vmem:[%s118 + $0x68] sm:$0xff]
      %v133 = vld [vmem:[%s118 + $0x70] sm:$0xff]
      %v134 = vld [vmem:[%s118 + $0x78] sm:$0xff]
      %v135 = vld [vmem:[%s118 + $0x80] sm:$0xff]
      %v136 = vld [vmem:[%s118 + $0x88] sm:$0xff]
      %v137 = vld [vmem:[%s118 + $0x90] sm:$0xff]
      %v138 = vld [vmem:[%s118 + $0x98] sm:$0xff]
      %v139 = vld [vmem:[%s118 + $0xa0] sm:$0xff]
      %v140 = vld [vmem:[%s118 + $0xa8] sm:$0xff]
      %v141 = vld [vmem:[%s118 + $0xb0] sm:$0xff]
      %v142 = vld [vmem:[%s118 + $0xb8] sm:$0xff]
      %v143 = vld [vmem:[%s118 + $0xc0] sm:$0xff]
      %v144 = vld [vmem:[%s118 + $0xc8] sm:$0xff]
      %v145 = vld [vmem:[%s118 + $0xd0] sm:$0xff]
      %v146 = vld [vmem:[%s118 + $0xd8] sm:$0xff]
      %v147 = vld [vmem:[%s118 + $0xe0] sm:$0xff]
      %v148 = vld [vmem:[%s118 + $0xe8] sm:$0xff]
      %v149 = vld [vmem:[%s118 + $0xf0] sm:$0xff]
      %v150 = vld [vmem:[%s118 + $0xf8] sm:$0xff]
      %v151 = vld [vmem:[%s118 + $0x100] sm:$0xff]
      %v152 = vld [vmem:[%s118 + $0x108] sm:$0xff]
      %v153 = vld [vmem:[%s118 + $0x110] sm:$0xff]
      %v154 = vld [vmem:[%s118 + $0x118] sm:$0xff]
      %v155 = vld [vmem:[%s118 + $0x120] sm:$0xff]
      %v156 = vld [vmem:[%s118 + $0x128] sm:$0xff]
      %v157 = vld [vmem:[%s118 + $0x130] sm:$0xff]
      %v158 = vld [vmem:[%s118 + $0x138] sm:$0xff]
      %v159 = vld [vmem:[%s118 + $0x140] sm:$0xff]
      %v160 = vld [vmem:[%s118 + $0x148] sm:$0xff]
      %v161 = vld [vmem:[%s118 + $0x150] sm:$0xff]
      %v162 = vld [vmem:[%s118 + $0x158] sm:$0xff]
      %v163 = vld [vmem:[%s118 + $0x160] sm:$0xff]
      %v164 = vld [vmem:[%s118 + $0x168] sm:$0xff]
      %v165 = vld [vmem:[%s118 + $0x170] sm:$0xff]
      %v166 = vld [vmem:[%s118 + $0x178] sm:$0xff]
      %v167 = vld [vmem:[#allocation2 + $0x7] sm:$0xff]
      %v168 = vld [vmem:[#allocation2 + $0xf] sm:$0xff]
      %v169 = vld [vmem:[#allocation2 + $0x27] sm:$0xff]
      %v170 = vld [vmem:[#allocation2 + $0x2f] sm:$0xff]
      %v171 = vpack.c.bf16 %v167, %v167
      %v172 = vpack.c.bf16 %v168, %v168
      %v173 = vpack.c.bf16 %v169, %v169
      %v174 = vpack.c.bf16 %v170, %v170
      %v175 = vld [vmem:[#allocation2 + $0x8] sm:$0xff]
      %v176 = vld [vmem:[#allocation2 + $0x10] sm:$0xff]
      %v177 = vld [vmem:[#allocation2 + $0x28] sm:$0xff]
      %v178 = vld [vmem:[#allocation2 + $0x30] sm:$0xff]
      %v179 = vpack.c.bf16 %v175, %v175
      %v180 = vpack.c.bf16 %v176, %v176
      %v181 = vpack.c.bf16 %v177, %v177
      %v182 = vpack.c.bf16 %v178, %v178
      %v183 = vld [vmem:[#allocation2 + $0x9] sm:$0xff]
      %v184 = vld [vmem:[#allocation2 + $0x11] sm:$0xff]
      %v185 = vld [vmem:[#allocation2 + $0x29] sm:$0xff]
      %v186 = vld [vmem:[#allocation2 + $0x31] sm:$0xff]
      %v187 = vpack.c.bf16 %v183, %v183
      %v188 = vpack.c.bf16 %v184, %v184
      %v189 = vpack.c.bf16 %v185, %v185
      %v190 = vpack.c.bf16 %v186, %v186
      %v195 = vunpack.c.l.b16 %v171
      %v196 = vunpack.c.l.b16 %v172
      %v197 = vunpack.c.l.b16 %v173
      %v198 = vunpack.c.l.b16 %v174
      %v199 = vpack.c.b16 %v196, %v195
      %v200 = vpack.c.b16 %v198, %v197
      %v207 = vunpack.c.l.b16 %v179
      %v208 = vunpack.c.l.b16 %v180
      %v209 = vunpack.c.l.b16 %v181
      %v210 = vunpack.c.l.b16 %v182
      %v211 = vpack.c.b16 %v208, %v207
      %v212 = vpack.c.b16 %v210, %v209
      %v219 = vunpack.c.l.b16 %v187
      %v220 = vunpack.c.l.b16 %v188
      %v221 = vunpack.c.l.b16 %v189
      %v222 = vunpack.c.l.b16 %v190
      %v223 = vpack.c.b16 %v220, %v219
      %v224 = vpack.c.b16 %v222, %v221
      %v275 = vunpack.c.l.b16 %v119
      %v276 = vunpack.c.h.b16 %v119
      %v277 = vunpack.c.l.b16 %v120
      %v278 = vunpack.c.h.b16 %v120
      %v279 = vunpack.c.l.b16 %v121
      %v280 = vunpack.c.h.b16 %v121
      %v281 = vunpack.c.l.b16 %v122
      %v282 = vunpack.c.h.b16 %v122
      %v283 = vunpack.c.l.b16 %v123
      %v284 = vunpack.c.h.b16 %v123
      %v285 = vunpack.c.l.b16 %v124
      %v286 = vunpack.c.h.b16 %v124
      %v287 = vunpack.c.l.b16 %v125
      %v288 = vunpack.c.h.b16 %v125
      %v289 = vunpack.c.l.b16 %v126
      %v290 = vunpack.c.h.b16 %v126
      %v291 = vunpack.c.l.b16 %v127
      %v292 = vunpack.c.h.b16 %v127
      %v293 = vunpack.c.l.b16 %v128
      %v294 = vunpack.c.h.b16 %v128
      %v295 = vunpack.c.l.b16 %v129
      %v296 = vunpack.c.h.b16 %v129
      %v297 = vunpack.c.l.b16 %v130
      %v298 = vunpack.c.h.b16 %v130
      %v299 = vunpack.c.l.b16 %v131
      %v300 = vunpack.c.h.b16 %v131
      %v301 = vunpack.c.l.b16 %v132
      %v302 = vunpack.c.h.b16 %v132
      %v303 = vunpack.c.l.b16 %v133
      %v304 = vunpack.c.h.b16 %v133
      %v305 = vunpack.c.l.b16 %v134
      %v306 = vunpack.c.h.b16 %v134
      %v307 = vunpack.c.l.b16 %v135
      %v308 = vunpack.c.h.b16 %v135
      %v309 = vunpack.c.l.b16 %v136
      %v310 = vunpack.c.h.b16 %v136
      %v311 = vunpack.c.l.b16 %v137
      %v312 = vunpack.c.h.b16 %v137
      %v313 = vunpack.c.l.b16 %v138
      %v314 = vunpack.c.h.b16 %v138
      %v315 = vunpack.c.l.b16 %v139
      %v316 = vunpack.c.h.b16 %v139
      %v317 = vunpack.c.l.b16 %v140
      %v318 = vunpack.c.h.b16 %v140
      %v319 = vunpack.c.l.b16 %v141
      %v320 = vunpack.c.h.b16 %v141
      %v321 = vunpack.c.l.b16 %v142
      %v322 = vunpack.c.h.b16 %v142
      %v323 = vunpack.c.l.b16 %v143
      %v324 = vunpack.c.h.b16 %v143
      %v325 = vunpack.c.l.b16 %v144
      %v326 = vunpack.c.h.b16 %v144
      %v327 = vunpack.c.l.b16 %v145
      %v328 = vunpack.c.h.b16 %v145
      %v329 = vunpack.c.l.b16 %v146
      %v330 = vunpack.c.h.b16 %v146
      %v331 = vunpack.c.l.b16 %v147
      %v332 = vunpack.c.h.b16 %v147
      %v333 = vunpack.c.l.b16 %v148
      %v334 = vunpack.c.h.b16 %v148
      %v335 = vunpack.c.l.b16 %v149
      %v336 = vunpack.c.h.b16 %v149
      %v337 = vunpack.c.l.b16 %v150
      %v338 = vunpack.c.h.b16 %v150
      %v339 = vunpack.c.l.b16 %v151
      %v340 = vunpack.c.h.b16 %v151
      %v341 = vunpack.c.l.b16 %v152
      %v342 = vunpack.c.h.b16 %v152
      %v343 = vunpack.c.l.b16 %v153
      %v344 = vunpack.c.h.b16 %v153
      %v345 = vunpack.c.l.b16 %v154
      %v346 = vunpack.c.h.b16 %v154
      %v347 = vunpack.c.l.b16 %v155
      %v348 = vunpack.c.h.b16 %v155
      %v349 = vunpack.c.l.b16 %v156
      %v350 = vunpack.c.h.b16 %v156
      %v351 = vunpack.c.l.b16 %v157
      %v352 = vunpack.c.h.b16 %v157
      %v353 = vunpack.c.l.b16 %v158
      %v354 = vunpack.c.h.b16 %v158
      %v355 = vunpack.c.l.b16 %v159
      %v356 = vunpack.c.h.b16 %v159
      %v357 = vunpack.c.l.b16 %v160
      %v358 = vunpack.c.h.b16 %v160
      %v359 = vunpack.c.l.b16 %v161
      %v360 = vunpack.c.h.b16 %v161
      %v361 = vunpack.c.l.b16 %v162
      %v362 = vunpack.c.h.b16 %v162
      %v363 = vunpack.c.l.b16 %v163
      %v364 = vunpack.c.h.b16 %v163
      %v365 = vunpack.c.l.b16 %v164
      %v366 = vunpack.c.h.b16 %v164
      %v367 = vunpack.c.l.b16 %v165
      %v368 = vunpack.c.h.b16 %v165
      %v369 = vunpack.c.l.b16 %v166
      %v370 = vunpack.c.h.b16 %v166
      %v371 = vpack.c.b16 %v277, %v275
      %v372 = vpack.c.b16 %v278, %v276
      %v373 = vpack.c.b16 %v281, %v279
      %v374 = vpack.c.b16 %v282, %v280
      %v375 = vpack.c.b16 %v285, %v283
      %v376 = vpack.c.b16 %v286, %v284
      %v377 = vpack.c.b16 %v289, %v287
      %v378 = vpack.c.b16 %v290, %v288
      %v379 = vpack.c.b16 %v293, %v291
      %v380 = vpack.c.b16 %v294, %v292
      %v381 = vpack.c.b16 %v297, %v295
      %v382 = vpack.c.b16 %v298, %v296
      %v383 = vpack.c.b16 %v301, %v299
      %v384 = vpack.c.b16 %v302, %v300
      %v385 = vpack.c.b16 %v305, %v303
      %v386 = vpack.c.b16 %v306, %v304
      %v387 = vpack.c.b16 %v309, %v307
      %v388 = vpack.c.b16 %v310, %v308
      %v389 = vpack.c.b16 %v313, %v311
      %v390 = vpack.c.b16 %v314, %v312
      %v391 = vpack.c.b16 %v317, %v315
      %v392 = vpack.c.b16 %v318, %v316
      %v393 = vpack.c.b16 %v321, %v319
      %v394 = vpack.c.b16 %v322, %v320
      %v395 = vpack.c.b16 %v325, %v323
      %v396 = vpack.c.b16 %v326, %v324
      %v397 = vpack.c.b16 %v329, %v327
      %v398 = vpack.c.b16 %v330, %v328
      %v399 = vpack.c.b16 %v333, %v331
      %v400 = vpack.c.b16 %v334, %v332
      %v401 = vpack.c.b16 %v337, %v335
      %v402 = vpack.c.b16 %v338, %v336
      %v403 = vpack.c.b16 %v341, %v339
      %v404 = vpack.c.b16 %v342, %v340
      %v405 = vpack.c.b16 %v345, %v343
      %v406 = vpack.c.b16 %v346, %v344
      %v407 = vpack.c.b16 %v349, %v347
      %v408 = vpack.c.b16 %v350, %v348
      %v409 = vpack.c.b16 %v353, %v351
      %v410 = vpack.c.b16 %v354, %v352
      %v411 = vpack.c.b16 %v357, %v355
      %v412 = vpack.c.b16 %v358, %v356
      %v413 = vpack.c.b16 %v361, %v359
      %v414 = vpack.c.b16 %v362, %v360
      %v415 = vpack.c.b16 %v365, %v363
      %v416 = vpack.c.b16 %v366, %v364
      %v417 = vpack.c.b16 %v369, %v367
      %v418 = vpack.c.b16 %v370, %v368
      %467 = vmatpush.bf16.msra.mxu0 %v385
      %468 = vmatpush.bf16.msra.mxu0 %v383
      %469 = vmatpush.bf16.msra.mxu0 %v381
      %470 = vmatpush.bf16.msra.mxu0 %v379
      %471 = vmatpush.bf16.msra.mxu0 %v377
      %472 = vmatpush.bf16.msra.mxu0 %v375
      %473 = vmatpush.bf16.msra.mxu0 %v373
      %474 = vmatpush.bf16.msra.mxu0 %v371
      %475 = vmatmul.bf16.gmra.mxu0 %v199
      %v476 = vpop.f32.mrf.mxu0
      %v477 = vadd.f32 0.0, %v476
      %v478 = vpop.f32.mrf.mxu0
      %v479 = vadd.f32 0.0, %v478
      %480 = vmatmul.bf16.gmra.mxu0 %v200
      %v481 = vpop.f32.mrf.mxu0
      %v482 = vadd.f32 0.0, %v481
      %v483 = vpop.f32.mrf.mxu0
      %v484 = vadd.f32 0.0, %v483
      %485 = vdwg.mxu0
      %486 = vmatpush.bf16.msra.mxu0 %v401
      %487 = vmatpush.bf16.msra.mxu0 %v399
      %488 = vmatpush.bf16.msra.mxu0 %v397
      %489 = vmatpush.bf16.msra.mxu0 %v395
      %490 = vmatpush.bf16.msra.mxu0 %v393
      %491 = vmatpush.bf16.msra.mxu0 %v391
      %492 = vmatpush.bf16.msra.mxu0 %v389
      %493 = vmatpush.bf16.msra.mxu0 %v387
      %494 = vmatmul.bf16.gmra.mxu0 %v211
      %v495 = vpop.f32.mrf.mxu0
      %v496 = vadd.f32 %v477, %v495
      %v497 = vpop.f32.mrf.mxu0
      %v498 = vadd.f32 %v479, %v497
      %499 = vmatmul.bf16.gmra.mxu0 %v212
      %v500 = vpop.f32.mrf.mxu0
      %v501 = vadd.f32 %v482, %v500
      %v502 = vpop.f32.mrf.mxu0
      %v503 = vadd.f32 %v484, %v502
      %504 = vdwg.mxu0
      %505 = vmatpush.bf16.msra.mxu0 %v417
      %506 = vmatpush.bf16.msra.mxu0 %v415
      %507 = vmatpush.bf16.msra.mxu0 %v413
      %508 = vmatpush.bf16.msra.mxu0 %v411
      %509 = vmatpush.bf16.msra.mxu0 %v409
      %510 = vmatpush.bf16.msra.mxu0 %v407
      %511 = vmatpush.bf16.msra.mxu0 %v405
      %512 = vmatpush.bf16.msra.mxu0 %v403
      %513 = vmatmul.bf16.gmra.mxu0 %v223
      %v514 = vpop.f32.mrf.mxu0
      %v515 = vadd.f32 %v496, %v514
      %v516 = vpop.f32.mrf.mxu0
      %v517 = vadd.f32 %v498, %v516
      %518 = vmatmul.bf16.gmra.mxu0 %v224
      %v519 = vpop.f32.mrf.mxu0
      %v520 = vadd.f32 %v501, %v519
      %v521 = vpop.f32.mrf.mxu0
      %v522 = vadd.f32 %v503, %v521
      %523 = vdwg.mxu0
      %524 = vmatpush.bf16.msra.mxu0 %v386
      %525 = vmatpush.bf16.msra.mxu0 %v384
      %526 = vmatpush.bf16.msra.mxu0 %v382
      %527 = vmatpush.bf16.msra.mxu0 %v380
      %528 = vmatpush.bf16.msra.mxu0 %v378
      %529 = vmatpush.bf16.msra.mxu0 %v376
      %530 = vmatpush.bf16.msra.mxu0 %v374
      %531 = vmatpush.bf16.msra.mxu0 %v372
      %532 = vmatmul.bf16.gmra.mxu0 %v199
      %v533 = vpop.f32.mrf.mxu0
      %v534 = vadd.f32 0.0, %v533
      %v535 = vpop.f32.mrf.mxu0
      %v536 = vadd.f32 0.0, %v535
      %537 = vmatmul.bf16.gmra.mxu0 %v200
      %v538 = vpop.f32.mrf.mxu0
      %v539 = vadd.f32 0.0, %v538
      %v540 = vpop.f32.mrf.mxu0
      %v541 = vadd.f32 0.0, %v540
      %542 = vdwg.mxu0
      %543 = vmatpush.bf16.msra.mxu0 %v402
      %544 = vmatpush.bf16.msra.mxu0 %v400
      %545 = vmatpush.bf16.msra.mxu0 %v398
      %546 = vmatpush.bf16.msra.mxu0 %v396
      %547 = vmatpush.bf16.msra.mxu0 %v394
      %548 = vmatpush.bf16.msra.mxu0 %v392
      %549 = vmatpush.bf16.msra.mxu0 %v390
      %550 = vmatpush.bf16.msra.mxu0 %v388
      %551 = vmatmul.bf16.gmra.mxu0 %v211
      %v552 = vpop.f32.mrf.mxu0
      %v553 = vadd.f32 %v534, %v552
      %v554 = vpop.f32.mrf.mxu0
      %v555 = vadd.f32 %v536, %v554
      %556 = vmatmul.bf16.gmra.mxu0 %v212
      %v557 = vpop.f32.mrf.mxu0
      %v558 = vadd.f32 %v539, %v557
      %v559 = vpop.f32.mrf.mxu0
      %v560 = vadd.f32 %v541, %v559
      %561 = vdwg.mxu0
      %562 = vmatpush.bf16.msra.mxu0 %v418
      %563 = vmatpush.bf16.msra.mxu0 %v416
      %564 = vmatpush.bf16.msra.mxu0 %v414
      %565 = vmatpush.bf16.msra.mxu0 %v412
      %566 = vmatpush.bf16.msra.mxu0 %v410
      %567 = vmatpush.bf16.msra.mxu0 %v408
      %568 = vmatpush.bf16.msra.mxu0 %v406
      %569 = vmatpush.bf16.msra.mxu0 %v404
      %570 = vmatmul.bf16.gmra.mxu0 %v223
      %v571 = vpop.f32.mrf.mxu0
      %v572 = vadd.f32 %v553, %v571
      %v573 = vpop.f32.mrf.mxu0
      %v574 = vadd.f32 %v555, %v573
      %575 = vmatmul.bf16.gmra.mxu0 %v224
      %v576 = vpop.f32.mrf.mxu0
      %v577 = vadd.f32 %v558, %v576
      %v578 = vpop.f32.mrf.mxu0
      %v579 = vadd.f32 %v560, %v578
      %580 = vdwg.mxu0
      %s581 = smul.u32 %s111, 2
      %s582 = scalar_lea.vmem %s2, %s581
      %v583 = vld [vmem:[%s582] sm:$0x3]
      %s584 = scalar_lea.vmem %s3, %s581
      %v585 = vld [vmem:[%s584] sm:$0x3]
      %v586 = vadd.f32 %v515, %v517
      %v587 = vadd.f32 %v586, %v520
      %v588 = vadd.f32 %v587, %v522
      %v589 = vrot.slane %v588, 4
      %v590 = vadd.f32 %v588, %v589
      %v591 = vrot.slane %v590, 2
      %v592 = vadd.f32 %v590, %v591
      %v593 = vrot.slane %v592, 1
      %v594 = vadd.f32 %v592, %v593
      %v595 = vadd.f32 %v572, %v574
      %v596 = vadd.f32 %v595, %v577
      %v597 = vadd.f32 %v596, %v579
      %v598 = vrot.slane %v597, 4
      %v599 = vadd.f32 %v597, %v598
      %v600 = vrot.slane %v599, 2
      %v601 = vadd.f32 %v599, %v600
      %v602 = vrot.slane %v601, 1
      %v603 = vadd.f32 %v601, %v602
      %v604 = vmul.f32 %v515, %v515
      %v605 = vmul.f32 %v572, %v572
      %v606 = vmul.f32 %v517, %v517
      %v607 = vmul.f32 %v574, %v574
      %v608 = vmul.f32 %v520, %v520
      %v609 = vmul.f32 %v577, %v577
      %v610 = vmul.f32 %v522, %v522
      %v611 = vmul.f32 %v579, %v579
      %v612 = vadd.f32 %v604, %v606
      %v613 = vadd.f32 %v612, %v608
      %v614 = vadd.f32 %v613, %v610
      %v615 = vrot.slane %v614, 4
      %v616 = vadd.f32 %v614, %v615
      %v617 = vrot.slane %v616, 2
      %v618 = vadd.f32 %v616, %v617
      %v619 = vrot.slane %v618, 1
      %v620 = vadd.f32 %v618, %v619
      %v621 = vadd.f32 %v605, %v607
      %v622 = vadd.f32 %v621, %v609
      %v623 = vadd.f32 %v622, %v611
      %v624 = vrot.slane %v623, 4
      %v625 = vadd.f32 %v623, %v624
      %v626 = vrot.slane %v625, 2
      %v627 = vadd.f32 %v625, %v626
      %v628 = vrot.slane %v627, 1
      %v629 = vadd.f32 %v627, %v628
      %vm630 = vcmask 1040384
      %v631 = vsel %vm630, %v594, %v620
      %v632 = vsel %vm630, %v603, %v629
      %v633 = vld [vmem:[%s7] sm:$0xff]
      %v634 = vld [vmem:[%s7 + $0x8] sm:$0xff]
      %v635 = vld [vmem:[%s7 + $0x10] sm:$0xff]
      %v636 = vld [vmem:[%s7 + $0x18] sm:$0xff]
      %v637 = vld [vmem:[%s7 + $0x20] sm:$0xff]
      %v638 = vld [vmem:[%s7 + $0x28] sm:$0xff]
      %v639 = vld [vmem:[%s7 + $0x30] sm:$0xff]
      %v640 = vld [vmem:[%s7 + $0x38] sm:$0xff]
      %v641 = vld [vmem:[%s7 + $0x40] sm:$0xff]
      %v642 = vld [vmem:[%s7 + $0x48] sm:$0xff]
      %v643 = vld [vmem:[%s7 + $0x50] sm:$0xff]
      %v644 = vld [vmem:[%s7 + $0x58] sm:$0xff]
      %v645 = vld [vmem:[%s7 + $0x60] sm:$0xff]
      %v646 = vld [vmem:[%s7 + $0x68] sm:$0xff]
      %v647 = vld [vmem:[%s7 + $0x70] sm:$0xff]
      %v648 = vld [vmem:[%s7 + $0x78] sm:$0xff]
      %v649 = vld [vmem:[%s7 + $0x80] sm:$0xff]
      %v650 = vld [vmem:[%s7 + $0x88] sm:$0xff]
      %v651 = vld [vmem:[%s7 + $0x90] sm:$0xff]
      %v652 = vld [vmem:[%s7 + $0x98] sm:$0xff]
      %v653 = vld [vmem:[%s7 + $0xa0] sm:$0xff]
      %v654 = vld [vmem:[%s7 + $0xa8] sm:$0xff]
      %v655 = vld [vmem:[%s7 + $0xb0] sm:$0xff]
      %v656 = vld [vmem:[%s7 + $0xb8] sm:$0xff]
      %v657 = vld [vmem:[%s7 + $0xc0] sm:$0xff]
      %v658 = vld [vmem:[%s7 + $0xc8] sm:$0xff]
      %v659 = vld [vmem:[%s7 + $0xd0] sm:$0xff]
      %v660 = vld [vmem:[%s7 + $0xd8] sm:$0xff]
      %v661 = vld [vmem:[%s7 + $0xe0] sm:$0xff]
      %v662 = vld [vmem:[%s7 + $0xe8] sm:$0xff]
      %v663 = vld [vmem:[%s7 + $0xf0] sm:$0xff]
      %v664 = vld [vmem:[%s7 + $0xf8] sm:$0xff]
      %665 = vmatpush.msra.mxu0 %v648
      %666 = vmatpush.msra.mxu0 %v647
      %667 = vmatpush.msra.mxu0 %v646
      %668 = vmatpush.msra.mxu0 %v645
      %669 = vmatpush.msra.mxu0 %v644
      %670 = vmatpush.msra.mxu0 %v643
      %671 = vmatpush.msra.mxu0 %v642
      %672 = vmatpush.msra.mxu0 %v641
      %673 = vmatpush.msra.mxu0 %v640
      %674 = vmatpush.msra.mxu0 %v639
      %675 = vmatpush.msra.mxu0 %v638
      %676 = vmatpush.msra.mxu0 %v637
      %677 = vmatpush.msra.mxu0 %v636
      %678 = vmatpush.msra.mxu0 %v635
      %679 = vmatpush.msra.mxu0 %v634
      %680 = vmatpush.msra.mxu0 %v633
      %681 = vmatmul.f32.gmra.mxu0 %v631
      %v682 = vpop.f32.mrf.mxu0
      %v683 = vadd.f32 0.0, %v682
      %684 = vdwg.mxu0
      %685 = vmatpush.msra.mxu0 %v664
      %686 = vmatpush.msra.mxu0 %v663
      %687 = vmatpush.msra.mxu0 %v662
      %688 = vmatpush.msra.mxu0 %v661
      %689 = vmatpush.msra.mxu0 %v660
      %690 = vmatpush.msra.mxu0 %v659
      %691 = vmatpush.msra.mxu0 %v658
      %692 = vmatpush.msra.mxu0 %v657
      %693 = vmatpush.msra.mxu0 %v656
      %694 = vmatpush.msra.mxu0 %v655
      %695 = vmatpush.msra.mxu0 %v654
      %696 = vmatpush.msra.mxu0 %v653
      %697 = vmatpush.msra.mxu0 %v652
      %698 = vmatpush.msra.mxu0 %v651
      %699 = vmatpush.msra.mxu0 %v650
      %700 = vmatpush.msra.mxu0 %v649
      %701 = vmatmul.f32.gmra.mxu0 %v632
      %v702 = vpop.f32.mrf.mxu0
      %v703 = vadd.f32 %v683, %v702
      %704 = vdwg.mxu0
      %v705 = vmul.f32 %v703, 0.001953125
      %v706 = vmul.f32 %v705, %v705
      %v708 = vrot.slane %v706, 7
      %v710 = vsub.f32 %v705, %v708
      %v711 = vsel %vm630, %v705, %v710
      %v712 = vld [vmem:[%s8] sm:$0xff]
      %v713 = vld [vmem:[%s8 + $0x8] sm:$0xff]
      %v714 = vld [vmem:[%s8 + $0x10] sm:$0xff]
      %v715 = vld [vmem:[%s8 + $0x18] sm:$0xff]
      %vm716 = vcmask 130048
      %v718 = vsel %vm716, %v711, 0
      %720 = vmatpush.msra.mxu0 0.0
      %721 = vmatpush.msra.mxu0 0.0
      %722 = vmatpush.msra.mxu0 0.0
      %723 = vmatpush.msra.mxu0 0.0
      %724 = vmatpush.msra.mxu0 0.0
      %725 = vmatpush.msra.mxu0 0.0
      %726 = vmatpush.msra.mxu0 0.0
      %727 = vmatpush.msra.mxu0 0.0
      %728 = vmatpush.msra.mxu0 0.0
      %729 = vmatpush.msra.mxu0 0.0
      %730 = vmatpush.msra.mxu0 0.0
      %731 = vmatpush.msra.mxu0 0.0
      %732 = vmatpush.msra.mxu0 0.0
      %733 = vmatpush.msra.mxu0 0.0
      %734 = vmatpush.msra.mxu0 %v714
      %735 = vmatpush.msra.mxu0 %v712
      %736 = vmatmul.f32.gmra.mxu0 %v718
      %v737 = vpop.f32.mrf.mxu0
      %v738 = vadd.f32 0.0, %v737
      %739 = vdwg.mxu0
      %740 = vmatpush.msra.mxu0 0.0
      %741 = vmatpush.msra.mxu0 0.0
      %742 = vmatpush.msra.mxu0 0.0
      %743 = vmatpush.msra.mxu0 0.0
      %744 = vmatpush.msra.mxu0 0.0
      %745 = vmatpush.msra.mxu0 0.0
      %746 = vmatpush.msra.mxu0 0.0
      %747 = vmatpush.msra.mxu0 0.0
      %748 = vmatpush.msra.mxu0 0.0
      %749 = vmatpush.msra.mxu0 0.0
      %750 = vmatpush.msra.mxu0 0.0
      %751 = vmatpush.msra.mxu0 0.0
      %752 = vmatpush.msra.mxu0 0.0
      %753 = vmatpush.msra.mxu0 0.0
      %754 = vmatpush.msra.mxu0 %v715
      %755 = vmatpush.msra.mxu0 %v713
      %756 = vmatmul.f32.gmra.mxu0 %v718
      %v757 = vpop.f32.mrf.mxu0
      %v758 = vadd.f32 0.0, %v757
      %759 = vdwg.mxu0
      %v760 = vadd.f32 %v738, 1e-05
      %v761 = vadd.f32 %v758, 1e-05
      %v762 = vrsqrt.pop %v760
      %v763 = vmul.f32 %v762, %v760
      %v764 = vmul.f32 %v763, %v762
      %v765 = vmul.f32 0.5, %v764
      %v766 = vsub.f32 1.5, %v765
      %v767 = vmul.f32 %v762, %v766
      %vm768 = vweird.f32 %v760
      %vm769 = vweird.f32 %v762
      %vm770 = vmor %vm768, %vm769
      %v771 = vsel %vm770, %v762, %v767
      %v772 = vrsqrt.pop %v761
      %v773 = vmul.f32 %v772, %v761
      %v774 = vmul.f32 %v773, %v772
      %v775 = vmul.f32 0.5, %v774
      %v776 = vsub.f32 1.5, %v775
      %v777 = vmul.f32 %v772, %v776
      %vm778 = vweird.f32 %v761
      %vm779 = vweird.f32 %v772
      %vm780 = vmor %vm778, %vm779
      %v781 = vsel %vm780, %v772, %v777
      %784 = vst [vmem:[#allocation1] sm:$0xff] %v771
      %785 = vst [vmem:[#allocation1 + $0x9] sm:$0xff] %v781
      %s786 = scalar_lea.vmem [#allocation1], 1
      %v787 = vld [vmem:[%s786] ss:$9 sm:$0xff]
      %v789 = vmul.f32 %v583, %v787
      %v790 = vperm.slane %v738, 0
      %v791 = vperm.slane %v758, 0
      %v792 = vsub.f32 %v515, %v790
      %v793 = vsub.f32 %v572, %v791
      %v794 = vsub.f32 %v517, %v790
      %v795 = vsub.f32 %v574, %v791
      %v796 = vsub.f32 %v520, %v790
      %v797 = vsub.f32 %v577, %v791
      %v798 = vsub.f32 %v522, %v790
      %v799 = vsub.f32 %v579, %v791
      %v801 = vperm.slane %v789, 0
      %v802 = vperm.slane %v789, 1
      %v805 = vmul.f32 %v792, %v801
      %v806 = vmul.f32 %v793, %v802
      %v807 = vmul.f32 %v794, %v801
      %v808 = vmul.f32 %v795, %v802
      %v809 = vmul.f32 %v796, %v801
      %v810 = vmul.f32 %v797, %v802
      %v811 = vmul.f32 %v798, %v801
      %v812 = vmul.f32 %v799, %v802
      %v814 = vperm.slane %v585, 0
      %v815 = vperm.slane %v585, 1
      %v818 = vadd.f32 %v805, %v814
      %v819 = vadd.f32 %v806, %v815
      %v820 = vadd.f32 %v807, %v814
      %v821 = vadd.f32 %v808, %v815
      %v822 = vadd.f32 %v809, %v814
      %v823 = vadd.f32 %v810, %v815
      %v824 = vadd.f32 %v811, %v814
      %v825 = vadd.f32 %v812, %v815
      %v826 = vmax.f32 %v818, 0.0
      %v827 = vmax.f32 %v819, 0.0
      %v828 = vmax.f32 %v820, 0.0
      %v829 = vmax.f32 %v821, 0.0
      %v830 = vmax.f32 %v822, 0.0
      %v831 = vmax.f32 %v823, 0.0
      %v832 = vmax.f32 %v824, 0.0
      %v833 = vmax.f32 %v825, 0.0
      %v834 = vpack.c.bf16 %v827, %v826
      %v835 = vpack.c.bf16 %v829, %v828
      %v836 = vpack.c.bf16 %v831, %v830
      %v837 = vpack.c.bf16 %v833, %v832
      %838 = vst [vmem:[#allocation3 + $0x8] sm:$0xff] %v834
      %839 = vst [vmem:[#allocation3 + $0x10] sm:$0xff] %v835
      %840 = vst [vmem:[#allocation3 + $0x28] sm:$0xff] %v836
      %841 = vst [vmem:[#allocation3 + $0x30] sm:$0xff] %v837
      %s842 = smul.addr %s116, 4
      %s843 = scalar_lea.vmem [#allocation7], %s842
      %v844 = vld [vmem:[%s843] sm:$0xf]
      %v845 = vld [vmem:[%s843 + $0x4] sm:$0xf]
      %v846 = vld [vmem:[%s843 + $0x8] sm:$0xf]
      %v847 = vld [vmem:[%s843 + $0xc] sm:$0xf]
      %v848 = vld [vmem:[%s843 + $0x10] sm:$0xf]
      %v849 = vld [vmem:[%s843 + $0x14] sm:$0xf]
      %v850 = vld [vmem:[%s843 + $0x18] sm:$0xf]
      %v851 = vld [vmem:[%s843 + $0x1c] sm:$0xf]
      %v852 = vld [vmem:[%s843 + $0x20] sm:$0xf]
      %v853 = vld [vmem:[%s843 + $0x24] sm:$0xf]
      %v854 = vld [vmem:[%s843 + $0x28] sm:$0xf]
      %v855 = vld [vmem:[%s843 + $0x2c] sm:$0xf]
      %v856 = vld [vmem:[%s843 + $0x30] sm:$0xf]
      %v857 = vld [vmem:[%s843 + $0x34] sm:$0xf]
      %v858 = vld [vmem:[%s843 + $0x38] sm:$0xf]
      %v859 = vld [vmem:[%s843 + $0x3c] sm:$0xf]
      %v860 = vld [vmem:[%s843 + $0x40] sm:$0xf]
      %v861 = vld [vmem:[%s843 + $0x44] sm:$0xf]
      %v862 = vld [vmem:[%s843 + $0x48] sm:$0xf]
      %v863 = vld [vmem:[%s843 + $0x4c] sm:$0xf]
      %v864 = vld [vmem:[%s843 + $0x50] sm:$0xf]
      %v865 = vld [vmem:[%s843 + $0x54] sm:$0xf]
      %v866 = vld [vmem:[%s843 + $0x58] sm:$0xf]
      %v867 = vld [vmem:[%s843 + $0x5c] sm:$0xf]
      %v868 = vld [vmem:[%s843 + $0x60] sm:$0xf]
      %v869 = vld [vmem:[%s843 + $0x64] sm:$0xf]
      %v870 = vld [vmem:[%s843 + $0x68] sm:$0xf]
      %v871 = vld [vmem:[%s843 + $0x6c] sm:$0xf]
      %v872 = vld [vmem:[%s843 + $0x70] sm:$0xf]
      %v873 = vld [vmem:[%s843 + $0x74] sm:$0xf]
      %v874 = vld [vmem:[%s843 + $0x78] sm:$0xf]
      %v875 = vld [vmem:[%s843 + $0x7c] sm:$0xf]
      %v876 = vld [vmem:[%s843 + $0x80] sm:$0xf]
      %v877 = vld [vmem:[%s843 + $0x84] sm:$0xf]
      %v878 = vld [vmem:[%s843 + $0x88] sm:$0xf]
      %v879 = vld [vmem:[%s843 + $0x8c] sm:$0xf]
      %v880 = vld [vmem:[%s843 + $0x90] sm:$0xf]
      %v881 = vld [vmem:[%s843 + $0x94] sm:$0xf]
      %v882 = vld [vmem:[%s843 + $0x98] sm:$0xf]
      %v883 = vld [vmem:[%s843 + $0x9c] sm:$0xf]
      %v884 = vld [vmem:[%s843 + $0xa0] sm:$0xf]
      %v885 = vld [vmem:[%s843 + $0xa4] sm:$0xf]
      %v886 = vld [vmem:[%s843 + $0xa8] sm:$0xf]
      %v887 = vld [vmem:[%s843 + $0xac] sm:$0xf]
      %v888 = vld [vmem:[%s843 + $0xb0] sm:$0xf]
      %v889 = vld [vmem:[%s843 + $0xb4] sm:$0xf]
      %v890 = vld [vmem:[%s843 + $0xb8] sm:$0xf]
      %v891 = vld [vmem:[%s843 + $0xbc] sm:$0xf]
      %v892 = vld [vmem:[%s843 + $0xc0] sm:$0xf]
      %v893 = vld [vmem:[%s843 + $0xc4] sm:$0xf]
      %v894 = vld [vmem:[%s843 + $0xc8] sm:$0xf]
      %v895 = vld [vmem:[%s843 + $0xcc] sm:$0xf]
      %v896 = vld [vmem:[%s843 + $0xd0] sm:$0xf]
      %v897 = vld [vmem:[%s843 + $0xd4] sm:$0xf]
      %v898 = vld [vmem:[%s843 + $0xd8] sm:$0xf]
      %v899 = vld [vmem:[%s843 + $0xdc] sm:$0xf]
      %v900 = vld [vmem:[%s843 + $0xe0] sm:$0xf]
      %v901 = vld [vmem:[%s843 + $0xe4] sm:$0xf]
      %v902 = vld [vmem:[%s843 + $0xe8] sm:$0xf]
      %v903 = vld [vmem:[%s843 + $0xec] sm:$0xf]
      %v904 = vld [vmem:[%s843 + $0xf0] sm:$0xf]
      %v905 = vld [vmem:[%s843 + $0xf4] sm:$0xf]
      %v906 = vld [vmem:[%s843 + $0xf8] sm:$0xf]
      %v907 = vld [vmem:[%s843 + $0xfc] sm:$0xf]
      %v908 = vld [vmem:[%s843 + $0x100] sm:$0xf]
      %v909 = vld [vmem:[%s843 + $0x104] sm:$0xf]
      %v910 = vld [vmem:[%s843 + $0x108] sm:$0xf]
      %v911 = vld [vmem:[%s843 + $0x10c] sm:$0xf]
      %v912 = vld [vmem:[%s843 + $0x110] sm:$0xf]
      %v913 = vld [vmem:[%s843 + $0x114] sm:$0xf]
      %v914 = vld [vmem:[%s843 + $0x118] sm:$0xf]
      %v915 = vld [vmem:[%s843 + $0x11c] sm:$0xf]
      %v916 = vld [vmem:[%s843 + $0x120] sm:$0xf]
      %v917 = vld [vmem:[%s843 + $0x124] sm:$0xf]
      %v918 = vld [vmem:[%s843 + $0x128] sm:$0xf]
      %v919 = vld [vmem:[%s843 + $0x12c] sm:$0xf]
      %v920 = vld [vmem:[%s843 + $0x130] sm:$0xf]
      %v921 = vld [vmem:[%s843 + $0x134] sm:$0xf]
      %v922 = vld [vmem:[%s843 + $0x138] sm:$0xf]
      %v923 = vld [vmem:[%s843 + $0x13c] sm:$0xf]
      %v924 = vld [vmem:[%s843 + $0x140] sm:$0xf]
      %v925 = vld [vmem:[%s843 + $0x144] sm:$0xf]
      %v926 = vld [vmem:[%s843 + $0x148] sm:$0xf]
      %v927 = vld [vmem:[%s843 + $0x14c] sm:$0xf]
      %v928 = vld [vmem:[%s843 + $0x150] sm:$0xf]
      %v929 = vld [vmem:[%s843 + $0x154] sm:$0xf]
      %v930 = vld [vmem:[%s843 + $0x158] sm:$0xf]
      %v931 = vld [vmem:[%s843 + $0x15c] sm:$0xf]
      %v932 = vld [vmem:[%s843 + $0x160] sm:$0xf]
      %v933 = vld [vmem:[%s843 + $0x164] sm:$0xf]
      %v934 = vld [vmem:[%s843 + $0x168] sm:$0xf]
      %v935 = vld [vmem:[%s843 + $0x16c] sm:$0xf]
      %v936 = vld [vmem:[%s843 + $0x170] sm:$0xf]
      %v937 = vld [vmem:[%s843 + $0x174] sm:$0xf]
      %v938 = vld [vmem:[%s843 + $0x178] sm:$0xf]
      %v939 = vld [vmem:[%s843 + $0x17c] sm:$0xf]
      %v940 = vld [vmem:[#allocation3] sm:$0x88]
      %v941 = vld [vmem:[#allocation3 + $0x8] sm:$0xff]
      %v942 = vld [vmem:[#allocation3 + $0x10] sm:$0xff]
      %v943 = vld [vmem:[#allocation3 + $0x20] sm:$0x88]
      %v944 = vld [vmem:[#allocation3 + $0x28] sm:$0xff]
      %v945 = vld [vmem:[#allocation3 + $0x30] sm:$0xff]
      %vm946 = vsmask.f32 4368
      %vm947 = vmor %vm90, %vm946
      %v949 = vshrl.u32 %v940, 16
      %v951 = vrot.slane %v949, 7
      %v952 = vrot.slane %v951, 4
      %v954 = vshrl.u32 %v941, 16
      %v956 = vrot.slane %v954, 7
      %v957 = vshll.u32 %v941, 16
      %v959 = vor.u32 %v956, %v957
      %v960 = vsel %vm947, %v952, %v959
      %v961 = vrot.slane %v956, 4
      %v963 = vshrl.u32 %v942, 16
      %v965 = vrot.slane %v963, 7
      %v966 = vshll.u32 %v942, 16
      %v968 = vor.u32 %v965, %v966
      %v969 = vsel %vm947, %v961, %v968
      %v971 = vshrl.u32 %v943, 16
      %v973 = vrot.slane %v971, 7
      %v974 = vrot.slane %v973, 4
      %v976 = vshrl.u32 %v944, 16
      %v978 = vrot.slane %v976, 7
      %v979 = vshll.u32 %v944, 16
      %v981 = vor.u32 %v978, %v979
      %v982 = vsel %vm947, %v974, %v981
      %v983 = vrot.slane %v978, 4
      %v985 = vshrl.u32 %v945, 16
      %v987 = vrot.slane %v985, 7
      %v988 = vshll.u32 %v945, 16
      %v990 = vor.u32 %v987, %v988
      %v991 = vsel %vm947, %v983, %v990
      %v992 = vld [vmem:[#allocation3 + $0x18] sm:$0x11]
      %v993 = vld [vmem:[#allocation3 + $0x38] sm:$0x11]
      %vm994 = vsmask.f32 3328
      %vm995 = vsmask.f32 7440
      %vm996 = vmor %vm994, %vm995
      %v997 = vrot.slane %v954, 4
      %v998 = vrot.slane %v957, 5
      %v999 = vor.u32 %v997, %v998
      %v1000 = vrot.slane %v999, 4
      %v1001 = vrot.slane %v966, 5
      %v1002 = vsel %vm996, %v1000, %v1001
      %v1003 = vrot.slane %v963, 4
      %v1004 = vor.u32 %v1003, %v1001
      %v1005 = vrot.slane %v1004, 4
      %v1007 = vshll.u32 %v992, 16
      %v1009 = vrot.slane %v1007, 5
      %v1010 = vsel %vm996, %v1005, %v1009
      %v1011 = vrot.slane %v976, 4
      %v1012 = vrot.slane %v979, 5
      %v1013 = vor.u32 %v1011, %v1012
      %v1014 = vrot.slane %v1013, 4
      %v1015 = vrot.slane %v988, 5
      %v1016 = vsel %vm996, %v1014, %v1015
      %v1017 = vrot.slane %v985, 4
      %v1018 = vor.u32 %v1017, %v1015
      %v1019 = vrot.slane %v1018, 4
      %v1021 = vshll.u32 %v993, 16
      %v1023 = vrot.slane %v1021, 5
      %v1024 = vsel %vm996, %v1019, %v1023
      %v1025 = vunpack.c.l.b16 %v960
      %v1026 = vunpack.c.h.b16 %v960
      %v1027 = vunpack.c.l.b16 %v969
      %v1028 = vunpack.c.h.b16 %v969
      %v1029 = vunpack.c.l.b16 %v982
      %v1030 = vunpack.c.h.b16 %v982
      %v1031 = vunpack.c.l.b16 %v991
      %v1032 = vunpack.c.h.b16 %v991
      %v1033 = vpack.c.b16 %v1027, %v1025
      %v1034 = vpack.c.b16 %v1028, %v1026
      %v1035 = vpack.c.b16 %v1031, %v1029
      %v1036 = vpack.c.b16 %v1032, %v1030
      %v1045 = vunpack.c.l.b16 %v941
      %v1046 = vunpack.c.h.b16 %v941
      %v1047 = vunpack.c.l.b16 %v942
      %v1048 = vunpack.c.h.b16 %v942
      %v1049 = vunpack.c.l.b16 %v944
      %v1050 = vunpack.c.h.b16 %v944
      %v1051 = vunpack.c.l.b16 %v945
      %v1052 = vunpack.c.h.b16 %v945
      %v1053 = vpack.c.b16 %v1047, %v1045
      %v1054 = vpack.c.b16 %v1048, %v1046
      %v1055 = vpack.c.b16 %v1051, %v1049
      %v1056 = vpack.c.b16 %v1052, %v1050
      %v1061 = vunpack.c.l.b16 %v1002
      %v1062 = vunpack.c.h.b16 %v1002
      %v1063 = vunpack.c.l.b16 %v1010
      %v1064 = vunpack.c.h.b16 %v1010
      %v1065 = vunpack.c.l.b16 %v1016
      %v1066 = vunpack.c.h.b16 %v1016
      %v1067 = vunpack.c.l.b16 %v1024
      %v1068 = vunpack.c.h.b16 %v1024
      %v1069 = vpack.c.b16 %v1063, %v1061
      %v1070 = vpack.c.b16 %v1064, %v1062
      %v1071 = vpack.c.b16 %v1067, %v1065
      %v1072 = vpack.c.b16 %v1068, %v1066
      %v1173 = vunpack.c.l.b16 %v844
      %v1174 = vunpack.c.l.b16 %v845
      %v1175 = vunpack.c.l.b16 %v846
      %v1176 = vunpack.c.l.b16 %v847
      %v1177 = vunpack.c.l.b16 %v848
      %v1178 = vunpack.c.l.b16 %v849
      %v1179 = vunpack.c.l.b16 %v850
      %v1180 = vunpack.c.l.b16 %v851
      %v1181 = vunpack.c.l.b16 %v852
      %v1182 = vunpack.c.l.b16 %v853
      %v1183 = vunpack.c.l.b16 %v854
      %v1184 = vunpack.c.l.b16 %v855
      %v1185 = vunpack.c.l.b16 %v856
      %v1186 = vunpack.c.l.b16 %v857
      %v1187 = vunpack.c.l.b16 %v858
      %v1188 = vunpack.c.l.b16 %v859
      %v1189 = vunpack.c.l.b16 %v860
      %v1190 = vunpack.c.l.b16 %v861
      %v1191 = vunpack.c.l.b16 %v862
      %v1192 = vunpack.c.l.b16 %v863
      %v1193 = vunpack.c.l.b16 %v864
      %v1194 = vunpack.c.l.b16 %v865
      %v1195 = vunpack.c.l.b16 %v866
      %v1196 = vunpack.c.l.b16 %v867
      %v1197 = vunpack.c.l.b16 %v868
      %v1198 = vunpack.c.l.b16 %v869
      %v1199 = vunpack.c.l.b16 %v870
      %v1200 = vunpack.c.l.b16 %v871
      %v1201 = vunpack.c.l.b16 %v872
      %v1202 = vunpack.c.l.b16 %v873
      %v1203 = vunpack.c.l.b16 %v874
      %v1204 = vunpack.c.l.b16 %v875
      %v1205 = vunpack.c.l.b16 %v876
      %v1206 = vunpack.c.l.b16 %v877
      %v1207 = vunpack.c.l.b16 %v878
      %v1208 = vunpack.c.l.b16 %v879
      %v1209 = vunpack.c.l.b16 %v880
      %v1210 = vunpack.c.l.b16 %v881
      %v1211 = vunpack.c.l.b16 %v882
      %v1212 = vunpack.c.l.b16 %v883
      %v1213 = vunpack.c.l.b16 %v884
      %v1214 = vunpack.c.l.b16 %v885
      %v1215 = vunpack.c.l.b16 %v886
      %v1216 = vunpack.c.l.b16 %v887
      %v1217 = vunpack.c.l.b16 %v888
      %v1218 = vunpack.c.l.b16 %v889
      %v1219 = vunpack.c.l.b16 %v890
      %v1220 = vunpack.c.l.b16 %v891
      %v1221 = vunpack.c.l.b16 %v892
      %v1222 = vunpack.c.l.b16 %v893
      %v1223 = vunpack.c.l.b16 %v894
      %v1224 = vunpack.c.l.b16 %v895
      %v1225 = vunpack.c.l.b16 %v896
      %v1226 = vunpack.c.l.b16 %v897
      %v1227 = vunpack.c.l.b16 %v898
      %v1228 = vunpack.c.l.b16 %v899
      %v1229 = vunpack.c.l.b16 %v900
      %v1230 = vunpack.c.l.b16 %v901
      %v1231 = vunpack.c.l.b16 %v902
      %v1232 = vunpack.c.l.b16 %v903
      %v1233 = vunpack.c.l.b16 %v904
      %v1234 = vunpack.c.l.b16 %v905
      %v1235 = vunpack.c.l.b16 %v906
      %v1236 = vunpack.c.l.b16 %v907
      %v1237 = vunpack.c.l.b16 %v908
      %v1238 = vunpack.c.l.b16 %v909
      %v1239 = vunpack.c.l.b16 %v910
      %v1240 = vunpack.c.l.b16 %v911
      %v1241 = vunpack.c.l.b16 %v912
      %v1242 = vunpack.c.l.b16 %v913
      %v1243 = vunpack.c.l.b16 %v914
      %v1244 = vunpack.c.l.b16 %v915
      %v1245 = vunpack.c.l.b16 %v916
      %v1246 = vunpack.c.l.b16 %v917
      %v1247 = vunpack.c.l.b16 %v918
      %v1248 = vunpack.c.l.b16 %v919
      %v1249 = vunpack.c.l.b16 %v920
      %v1250 = vunpack.c.l.b16 %v921
      %v1251 = vunpack.c.l.b16 %v922
      %v1252 = vunpack.c.l.b16 %v923
      %v1253 = vunpack.c.l.b16 %v924
      %v1254 = vunpack.c.l.b16 %v925
      %v1255 = vunpack.c.l.b16 %v926
      %v1256 = vunpack.c.l.b16 %v927
      %v1257 = vunpack.c.l.b16 %v928
      %v1258 = vunpack.c.l.b16 %v929
      %v1259 = vunpack.c.l.b16 %v930
      %v1260 = vunpack.c.l.b16 %v931
      %v1261 = vunpack.c.l.b16 %v932
      %v1262 = vunpack.c.l.b16 %v933
      %v1263 = vunpack.c.l.b16 %v934
      %v1264 = vunpack.c.l.b16 %v935
      %v1265 = vunpack.c.l.b16 %v936
      %v1266 = vunpack.c.l.b16 %v937
      %v1267 = vunpack.c.l.b16 %v938
      %v1268 = vunpack.c.l.b16 %v939
      %v1269 = vpack.c.b16 %v1174, %v1173
      %v1270 = vpack.c.b16 %v1176, %v1175
      %v1271 = vpack.c.b16 %v1178, %v1177
      %v1272 = vpack.c.b16 %v1180, %v1179
      %v1273 = vpack.c.b16 %v1182, %v1181
      %v1274 = vpack.c.b16 %v1184, %v1183
      %v1275 = vpack.c.b16 %v1186, %v1185
      %v1276 = vpack.c.b16 %v1188, %v1187
      %v1277 = vpack.c.b16 %v1190, %v1189
      %v1278 = vpack.c.b16 %v1192, %v1191
      %v1279 = vpack.c.b16 %v1194, %v1193
      %v1280 = vpack.c.b16 %v1196, %v1195
      %v1281 = vpack.c.b16 %v1198, %v1197
      %v1282 = vpack.c.b16 %v1200, %v1199
      %v1283 = vpack.c.b16 %v1202, %v1201
      %v1284 = vpack.c.b16 %v1204, %v1203
      %v1285 = vpack.c.b16 %v1206, %v1205
      %v1286 = vpack.c.b16 %v1208, %v1207
      %v1287 = vpack.c.b16 %v1210, %v1209
      %v1288 = vpack.c.b16 %v1212, %v1211
      %v1289 = vpack.c.b16 %v1214, %v1213
      %v1290 = vpack.c.b16 %v1216, %v1215
      %v1291 = vpack.c.b16 %v1218, %v1217
      %v1292 = vpack.c.b16 %v1220, %v1219
      %v1293 = vpack.c.b16 %v1222, %v1221
      %v1294 = vpack.c.b16 %v1224, %v1223
      %v1295 = vpack.c.b16 %v1226, %v1225
      %v1296 = vpack.c.b16 %v1228, %v1227
      %v1297 = vpack.c.b16 %v1230, %v1229
      %v1298 = vpack.c.b16 %v1232, %v1231
      %v1299 = vpack.c.b16 %v1234, %v1233
      %v1300 = vpack.c.b16 %v1236, %v1235
      %v1301 = vpack.c.b16 %v1238, %v1237
      %v1302 = vpack.c.b16 %v1240, %v1239
      %v1303 = vpack.c.b16 %v1242, %v1241
      %v1304 = vpack.c.b16 %v1244, %v1243
      %v1305 = vpack.c.b16 %v1246, %v1245
      %v1306 = vpack.c.b16 %v1248, %v1247
      %v1307 = vpack.c.b16 %v1250, %v1249
      %v1308 = vpack.c.b16 %v1252, %v1251
      %v1309 = vpack.c.b16 %v1254, %v1253
      %v1310 = vpack.c.b16 %v1256, %v1255
      %v1311 = vpack.c.b16 %v1258, %v1257
      %v1312 = vpack.c.b16 %v1260, %v1259
      %v1313 = vpack.c.b16 %v1262, %v1261
      %v1314 = vpack.c.b16 %v1264, %v1263
      %v1315 = vpack.c.b16 %v1266, %v1265
      %v1316 = vpack.c.b16 %v1268, %v1267
      %1365 = vmatpush.bf16.msra.mxu0 %v1276
      %1366 = vmatpush.bf16.msra.mxu0 %v1275
      %1367 = vmatpush.bf16.msra.mxu0 %v1274
      %1368 = vmatpush.bf16.msra.mxu0 %v1273
      %1369 = vmatpush.bf16.msra.mxu0 %v1272
      %1370 = vmatpush.bf16.msra.mxu0 %v1271
      %1371 = vmatpush.bf16.msra.mxu0 %v1270
      %1372 = vmatpush.bf16.msra.mxu0 %v1269
      %1373 = vmatmul.bf16.gmra.mxu0 %v1033
      %v1374 = vpop.f32.mrf.mxu0
      %v1375 = vadd.f32 0.0, %v1374
      %v1376 = vpop.f32.mrf.mxu0
      %v1377 = vadd.f32 0.0, %v1376
      %1378 = vmatmul.bf16.gmra.mxu0 %v1035
      %v1379 = vpop.f32.mrf.mxu0
      %v1380 = vadd.f32 0.0, %v1379
      %v1381 = vpop.f32.mrf.mxu0
      %v1382 = vadd.f32 0.0, %v1381
      %1383 = vdwg.mxu0
      %1384 = vmatpush.bf16.msra.mxu0 %v1284
      %1385 = vmatpush.bf16.msra.mxu0 %v1283
      %1386 = vmatpush.bf16.msra.mxu0 %v1282
      %1387 = vmatpush.bf16.msra.mxu0 %v1281
      %1388 = vmatpush.bf16.msra.mxu0 %v1280
      %1389 = vmatpush.bf16.msra.mxu0 %v1279
      %1390 = vmatpush.bf16.msra.mxu0 %v1278
      %1391 = vmatpush.bf16.msra.mxu0 %v1277
      %1392 = vmatmul.bf16.gmra.mxu0 %v1034
      %v1393 = vpop.f32.mrf.mxu0
      %v1394 = vadd.f32 %v1375, %v1393
      %v1395 = vpop.f32.mrf.mxu0
      %v1396 = vadd.f32 %v1377, %v1395
      %1397 = vmatmul.bf16.gmra.mxu0 %v1036
      %v1398 = vpop.f32.mrf.mxu0
      %v1399 = vadd.f32 %v1380, %v1398
      %v1400 = vpop.f32.mrf.mxu0
      %v1401 = vadd.f32 %v1382, %v1400
      %1402 = vdwg.mxu0
      %1403 = vmatpush.bf16.msra.mxu0 %v1292
      %1404 = vmatpush.bf16.msra.mxu0 %v1291
      %1405 = vmatpush.bf16.msra.mxu0 %v1290
      %1406 = vmatpush.bf16.msra.mxu0 %v1289
      %1407 = vmatpush.bf16.msra.mxu0 %v1288
      %1408 = vmatpush.bf16.msra.mxu0 %v1287
      %1409 = vmatpush.bf16.msra.mxu0 %v1286
      %1410 = vmatpush.bf16.msra.mxu0 %v1285
      %1411 = vmatmul.bf16.gmra.mxu0 %v1053
      %v1412 = vpop.f32.mrf.mxu0
      %v1413 = vadd.f32 %v1394, %v1412
      %v1414 = vpop.f32.mrf.mxu0
      %v1415 = vadd.f32 %v1396, %v1414
      %1416 = vmatmul.bf16.gmra.mxu0 %v1055
      %v1417 = vpop.f32.mrf.mxu0
      %v1418 = vadd.f32 %v1399, %v1417
      %v1419 = vpop.f32.mrf.mxu0
      %v1420 = vadd.f32 %v1401, %v1419
      %1421 = vdwg.mxu0
      %1422 = vmatpush.bf16.msra.mxu0 %v1300
      %1423 = vmatpush.bf16.msra.mxu0 %v1299
      %1424 = vmatpush.bf16.msra.mxu0 %v1298
      %1425 = vmatpush.bf16.msra.mxu0 %v1297
      %1426 = vmatpush.bf16.msra.mxu0 %v1296
      %1427 = vmatpush.bf16.msra.mxu0 %v1295
      %1428 = vmatpush.bf16.msra.mxu0 %v1294
      %1429 = vmatpush.bf16.msra.mxu0 %v1293
      %1430 = vmatmul.bf16.gmra.mxu0 %v1054
      %v1431 = vpop.f32.mrf.mxu0
      %v1432 = vadd.f32 %v1413, %v1431
      %v1433 = vpop.f32.mrf.mxu0
      %v1434 = vadd.f32 %v1415, %v1433
      %1435 = vmatmul.bf16.gmra.mxu0 %v1056
      %v1436 = vpop.f32.mrf.mxu0
      %v1437 = vadd.f32 %v1418, %v1436
      %v1438 = vpop.f32.mrf.mxu0
      %v1439 = vadd.f32 %v1420, %v1438
      %1440 = vdwg.mxu0
      %1441 = vmatpush.bf16.msra.mxu0 %v1308
      %1442 = vmatpush.bf16.msra.mxu0 %v1307
      %1443 = vmatpush.bf16.msra.mxu0 %v1306
      %1444 = vmatpush.bf16.msra.mxu0 %v1305
      %1445 = vmatpush.bf16.msra.mxu0 %v1304
      %1446 = vmatpush.bf16.msra.mxu0 %v1303
      %1447 = vmatpush.bf16.msra.mxu0 %v1302
      %1448 = vmatpush.bf16.msra.mxu0 %v1301
      %1449 = vmatmul.bf16.gmra.mxu0 %v1069
      %v1450 = vpop.f32.mrf.mxu0
      %v1451 = vadd.f32 %v1432, %v1450
      %v1452 = vpop.f32.mrf.mxu0
      %v1453 = vadd.f32 %v1434, %v1452
      %1454 = vmatmul.bf16.gmra.mxu0 %v1071
      %v1455 = vpop.f32.mrf.mxu0
      %v1456 = vadd.f32 %v1437, %v1455
      %v1457 = vpop.f32.mrf.mxu0
      %v1458 = vadd.f32 %v1439, %v1457
      %1459 = vdwg.mxu0
      %1460 = vmatpush.bf16.msra.mxu0 %v1316
      %1461 = vmatpush.bf16.msra.mxu0 %v1315
      %1462 = vmatpush.bf16.msra.mxu0 %v1314
      %1463 = vmatpush.bf16.msra.mxu0 %v1313
      %1464 = vmatpush.bf16.msra.mxu0 %v1312
      %1465 = vmatpush.bf16.msra.mxu0 %v1311
      %1466 = vmatpush.bf16.msra.mxu0 %v1310
      %1467 = vmatpush.bf16.msra.mxu0 %v1309
      %1468 = vmatmul.bf16.gmra.mxu0 %v1070
      %v1469 = vpop.f32.mrf.mxu0
      %v1470 = vadd.f32 %v1451, %v1469
      %v1471 = vpop.f32.mrf.mxu0
      %v1472 = vadd.f32 %v1453, %v1471
      %1473 = vmatmul.bf16.gmra.mxu0 %v1072
      %v1474 = vpop.f32.mrf.mxu0
      %v1475 = vadd.f32 %v1456, %v1474
      %v1476 = vpop.f32.mrf.mxu0
      %v1477 = vadd.f32 %v1458, %v1476
      %1478 = vdwg.mxu0
      %s1479 = scalar_lea.vmem %s5, %s111
      %v1480 = vld [vmem:[%s1479] sm:$0x1]
      %s1481 = scalar_lea.vmem %s6, %s111
      %v1482 = vld [vmem:[%s1481] sm:$0x1]
      %v1483 = vadd.f32 %v1470, %v1472
      %v1484 = vadd.f32 %v1483, %v1475
      %v1485 = vadd.f32 %v1484, %v1477
      %v1486 = vrot.slane %v1485, 4
      %v1487 = vadd.f32 %v1485, %v1486
      %v1488 = vrot.slane %v1487, 2
      %v1489 = vadd.f32 %v1487, %v1488
      %v1490 = vrot.slane %v1489, 1
      %v1491 = vadd.f32 %v1489, %v1490
      %v1492 = vmul.f32 %v1470, %v1470
      %v1493 = vmul.f32 %v1472, %v1472
      %v1494 = vmul.f32 %v1475, %v1475
      %v1495 = vmul.f32 %v1477, %v1477
      %v1496 = vadd.f32 %v1492, %v1493
      %v1497 = vadd.f32 %v1496, %v1494
      %v1498 = vadd.f32 %v1497, %v1495
      %v1499 = vrot.slane %v1498, 4
      %v1500 = vadd.f32 %v1498, %v1499
      %v1501 = vrot.slane %v1500, 2
      %v1502 = vadd.f32 %v1500, %v1501
      %v1503 = vrot.slane %v1502, 1
      %v1504 = vadd.f32 %v1502, %v1503
      %v1505 = vsel %vm630, %v1491, %v1504
      %v1506 = vld [vmem:[%s9] sm:$0xff]
      %v1507 = vld [vmem:[%s9 + $0x8] sm:$0xff]
      %v1508 = vld [vmem:[%s9 + $0x10] sm:$0xff]
      %v1509 = vld [vmem:[%s9 + $0x18] sm:$0xff]
      %v1510 = vld [vmem:[%s9 + $0x20] sm:$0xff]
      %v1511 = vld [vmem:[%s9 + $0x28] sm:$0xff]
      %v1512 = vld [vmem:[%s9 + $0x30] sm:$0xff]
      %v1513 = vld [vmem:[%s9 + $0x38] sm:$0xff]
      %v1514 = vld [vmem:[%s9 + $0x40] sm:$0xff]
      %v1515 = vld [vmem:[%s9 + $0x48] sm:$0xff]
      %v1516 = vld [vmem:[%s9 + $0x50] sm:$0xff]
      %v1517 = vld [vmem:[%s9 + $0x58] sm:$0xff]
      %v1518 = vld [vmem:[%s9 + $0x60] sm:$0xff]
      %v1519 = vld [vmem:[%s9 + $0x68] sm:$0xff]
      %v1520 = vld [vmem:[%s9 + $0x70] sm:$0xff]
      %v1521 = vld [vmem:[%s9 + $0x78] sm:$0xff]
      %1522 = vmatpush.msra.mxu0 %v1521
      %1523 = vmatpush.msra.mxu0 %v1520
      %1524 = vmatpush.msra.mxu0 %v1519
      %1525 = vmatpush.msra.mxu0 %v1518
      %1526 = vmatpush.msra.mxu0 %v1517
      %1527 = vmatpush.msra.mxu0 %v1516
      %1528 = vmatpush.msra.mxu0 %v1515
      %1529 = vmatpush.msra.mxu0 %v1514
      %1530 = vmatpush.msra.mxu0 %v1513
      %1531 = vmatpush.msra.mxu0 %v1512
      %1532 = vmatpush.msra.mxu0 %v1511
      %1533 = vmatpush.msra.mxu0 %v1510
      %1534 = vmatpush.msra.mxu0 %v1509
      %1535 = vmatpush.msra.mxu0 %v1508
      %1536 = vmatpush.msra.mxu0 %v1507
      %1537 = vmatpush.msra.mxu0 %v1506
      %1538 = vmatmul.f32.gmra.mxu0 %v1505
      %v1539 = vpop.f32.mrf.mxu0
      %v1540 = vadd.f32 0.0, %v1539
      %1541 = vdwg.mxu0
      %v1542 = vmul.f32 %v1540, 0.001953125
      %v1543 = vmul.f32 %v1542, %v1542
      %v1545 = vrot.slane %v1543, 7
      %v1547 = vsub.f32 %v1542, %v1545
      %v1548 = vsel %vm630, %v1542, %v1547
      %v1549 = vld [vmem:[%s10] sm:$0xff]
      %vm1550 = vcmask 64512
      %v1552 = vsel %vm1550, %v1548, 0
      %1554 = vmatpush.msra.mxu0 0.0
      %1555 = vmatpush.msra.mxu0 0.0
      %1556 = vmatpush.msra.mxu0 0.0
      %1557 = vmatpush.msra.mxu0 0.0
      %1558 = vmatpush.msra.mxu0 0.0
      %1559 = vmatpush.msra.mxu0 0.0
      %1560 = vmatpush.msra.mxu0 0.0
      %1561 = vmatpush.msra.mxu0 0.0
      %1562 = vmatpush.msra.mxu0 0.0
      %1563 = vmatpush.msra.mxu0 0.0
      %1564 = vmatpush.msra.mxu0 0.0
      %1565 = vmatpush.msra.mxu0 0.0
      %1566 = vmatpush.msra.mxu0 0.0
      %1567 = vmatpush.msra.mxu0 0.0
      %1568 = vmatpush.msra.mxu0 0.0
      %1569 = vmatpush.msra.mxu0 %v1549
      %1570 = vmatmul.f32.gmra.mxu0 %v1552
      %v1571 = vpop.f32.mrf.mxu0
      %v1572 = vadd.f32 0.0, %v1571
      %1573 = vdwg.mxu0
      %v1574 = vadd.f32 %v1572, 1e-05
      %v1575 = vrsqrt.pop %v1574
      %v1576 = vmul.f32 %v1575, %v1574
      %v1577 = vmul.f32 %v1576, %v1575
      %v1578 = vmul.f32 0.5, %v1577
      %v1579 = vsub.f32 1.5, %v1578
      %v1580 = vmul.f32 %v1575, %v1579
      %vm1581 = vweird.f32 %v1574
      %vm1582 = vweird.f32 %v1575
      %vm1583 = vmor %vm1581, %vm1582
      %v1584 = vsel %vm1583, %v1575, %v1580
      %1586 = vst [vmem:[#allocation1] sm:$0xff] %v1584
      %s1587 = scalar_lea.vmem [#allocation1], 1
      %v1588 = vld [vmem:[%s1587] ss:$9 sm:$0xff]
      %v1590 = vmul.f32 %v1480, %v1588
      %v1591 = vperm.slane %v1572, 0
      %v1592 = vsub.f32 %v1470, %v1591
      %v1593 = vsub.f32 %v1472, %v1591
      %v1594 = vsub.f32 %v1475, %v1591
      %v1595 = vsub.f32 %v1477, %v1591
      %v1597 = vperm.slane %v1590, 0
      %v1599 = vmul.f32 %v1592, %v1597
      %v1600 = vmul.f32 %v1593, %v1597
      %v1601 = vmul.f32 %v1594, %v1597
      %v1602 = vmul.f32 %v1595, %v1597
      %v1604 = vperm.slane %v1482, 0
      %v1606 = vadd.f32 %v1599, %v1604
      %v1607 = vadd.f32 %v1600, %v1604
      %v1608 = vadd.f32 %v1601, %v1604
      %v1609 = vadd.f32 %v1602, %v1604
      %v1610 = vmax.f32 %v1606, 0.0
      %v1611 = vmax.f32 %v1607, 0.0
      %v1612 = vmax.f32 %v1608, 0.0
      %v1613 = vmax.f32 %v1609, 0.0
      %v1614 = vld [vmem:[#allocation2 + $0x8] sm:$0xff]
      %v1615 = vld [vmem:[#allocation2 + $0x10] sm:$0xff]
      %v1616 = vld [vmem:[#allocation2 + $0x28] sm:$0xff]
      %v1617 = vld [vmem:[#allocation2 + $0x30] sm:$0xff]
      %v1618 = vadd.f32 %v1614, %v1610
      %v1619 = vadd.f32 %v1615, %v1611
      %v1620 = vadd.f32 %v1616, %v1612
      %v1621 = vadd.f32 %v1617, %v1613
      %1622 = vst [vmem:[#allocation2 + $0x8] sm:$0xff] %v1618
      %1623 = vst [vmem:[#allocation2 + $0x10] sm:$0xff] %v1619
      %1624 = vst [vmem:[#allocation2 + $0x28] sm:$0xff] %v1620
      %1625 = vst [vmem:[#allocation2 + $0x30] sm:$0xff] %v1621
    $region58: #{tpu_custom_call.1} parent=1 // loop_footer
      %s115 = sadd.s32 1, %s111
    $region59: #{tpu_custom_call.1} parent=1 // loop_footer_branch
      %110 = sbr.rel target = $region55
    $region60: #{tpu_custom_call.1} parent=1 // loop_exit
      _
    %v1626 = vld [vmem:[#allocation2 + $0x8] sm:$0xff]
    %v1627 = vld [vmem:[#allocation2 + $0x10] sm:$0xff]
    %v1628 = vld [vmem:[#allocation2 + $0x28] sm:$0xff]
    %v1629 = vld [vmem:[#allocation2 + $0x30] sm:$0xff]
    %1630 = vst [vmem:[#allocation9] sm:$0xff] %v1626
    %1631 = vst [vmem:[#allocation9 + $0x8] sm:$0xff] %v1627
    %1632 = vst [vmem:[#allocation9 + $0x10] sm:$0xff] %v1628
    %1633 = vst [vmem:[#allocation9 + $0x18] sm:$0xff] %v1629
    // Predicated region
    $region61: #{tpu_custom_call.1} parent=1 // pred_check
      _
    $region62: #{tpu_custom_call.1} parent=1 // pred_check_branch
      %1635 = sbr.rel (0) target = $region64
    $region63: #{tpu_custom_call.1} parent=1 // pred_region
      %1637 = vsyncadd [#allocation6], 0
      %s1638 = sshll.u32 [#allocation9], 4
      %s1639 = int_to_ptr.vmem [resolvable:$true] %s1638
      %s1640 = sshll.u32 %s11, 4
      %s1641 = int_to_ptr.hbm [resolvable:$true] %s1640
      %1646 = dma.vmem_to_hbm [thread:$0]  %s1639, 512, %s1641, [#allocation6], 128, 128, 8
    $region64: #{tpu_custom_call.1} parent=1 // pred_fallthru
      _
    // Predicated region
    $region65: #{tpu_custom_call.1} parent=1 // pred_check
      _
    $region66: #{tpu_custom_call.1} parent=1 // pred_check_branch
      %1648 = sbr.rel (0) target = $region68
    $region67: #{tpu_custom_call.1} parent=1 // pred_region
      %1650 = dma.done [#allocation6], 512
    $region68: #{tpu_custom_call.1} parent=1 // pred_fallthru
      _
    %1651 = vsyncpa [#allocation5], 1
    %1652 = vsyncpa [#allocation8], 1
    %1653 = vsyncpa [#allocation6], 1

</llo_original>
